<compile_context>
chip_gen: v6e
topology: v6e:2x2x1
jax: 0.10.0
libtpu: 0.0.40
codegen_flags: <defaults>
</compile_context>

<pallas_src>
import functools

import jax
import jax.numpy as jnp
from jax import lax
from jax.experimental import pallas as pl
from jax.experimental.pallas import tpu as pltpu


def _round_up(x: int, m: int) -> int:
    return ((x + m - 1) // m) * m


def _spmm_kernel(adj_ref, emb_ref, out_ref, acc_ref=None, *,
                 tk: int, k_total: int, resident: bool, mask_last_k: bool):
    # Grid: (i = row block of adj/out, k = reduction block).
    k = pl.program_id(1)

    a = adj_ref[...]
    if mask_last_k:
        # The ragged last K block of adj overhangs the array: its out-of-range
        # VMEM contents are unspecified (could be NaN).  Zero those columns;
        # the matching zero-padded embeds rows then contribute exactly 0.
        col = lax.broadcasted_iota(jnp.int32, a.shape, dimension=1)
        valid = k_total - k * tk          # == tk on every non-last block
        a = jnp.where(col < valid, a, jnp.zeros_like(a))

    if resident:
        # embeds fully VMEM-resident: slice the k-th reduction chunk.
        start = pl.multiple_of(k * tk, tk)
        b = emb_ref[pl.ds(start, tk), :]
    else:
        # Streamed (tk, D) block (large-K / v7x fallback).
        b = emb_ref[...]

    part = jnp.dot(a, b, preferred_element_type=jnp.float32)

    if acc_ref is None:
        # Single reduction step: no scratch, no init/finalize overhead.
        out_ref[...] = part.astype(out_ref.dtype)
    else:
        @pl.when(k == 0)
        def _():
            acc_ref[...] = jnp.zeros_like(acc_ref)

        acc_ref[...] += part

        @pl.when(k == pl.num_programs(1) - 1)
        def _():
            out_ref[...] = acc_ref[...].astype(out_ref.dtype)


def gcn_layer(adj: jax.Array, embeds: jax.Array, *, tm: int = 512,
              tk: int = 1024, resident_vmem_budget_bytes: int = 24 << 20):
    """out[N, D] = adj[N, K] @ embeds[K, D]   (GCNLayer.forward, spmm densified).

    Operands are used in the dtype they arrive in (supply bf16 from the
    producer for the bandwidth-bound fast path); output dtype = embeds.dtype.
    """
    N, K = adj.shape
    K2, D = embeds.shape
    assert K == K2, "adj columns must match embeds rows"

    out_dtype = embeds.dtype

    # Clamp tiles to the 128-aligned problem size.  adj is never padded; only
    # embeds' K axis is zero-padded so every embeds block is exact.
    tm = min(tm, _round_up(N, 128))
    tk = min(tk, _round_up(K, 128))
    k_pad = _round_up(K, tk)
    emb_p = embeds if k_pad == K else jnp.pad(embeds, ((0, k_pad - K), (0, 0)))

    grid_i = pl.cdiv(N, tm)          # ragged last row block handled by Pallas
    grid_k = k_pad // tk
    mask_last_k = k_pad != K

    emb_itemsize = emb_p.dtype.itemsize
    resident = k_pad * D * emb_itemsize <= resident_vmem_budget_bytes

    if resident:
        # Whole embeds in VMEM, constant block index -> single DMA; a constant
        # block never needs double buffering.
        emb_spec = pl.BlockSpec((k_pad, D), lambda i, k: (0, 0),
                                pipeline_mode=pl.Buffered(1))
        emb_vmem = k_pad * D * emb_itemsize
    else:
        # Streamed fallback for large K (notably v7x's 64 MiB VMEM).
        emb_spec = pl.BlockSpec((tk, D), lambda i, k: (k, 0))
        emb_vmem = 2 * tk * D * emb_itemsize

    use_acc = grid_k > 1
    scratch = [pltpu.VMEM((tm, D), jnp.float32)] if use_acc else []

    required_vmem = (
        2 * tm * tk * adj.dtype.itemsize                 # adj, double-buffered
        + emb_vmem                                       # embeds
        + 2 * tm * D * jnp.dtype(out_dtype).itemsize     # out, double-buffered
        + (tm * D * 4 if use_acc else 0)                 # f32 accumulator
    )
    vmem_limit = min(max(int(1.5 * required_vmem) + (4 << 20), 32 << 20),
                     64 << 20)

    kernel = functools.partial(_spmm_kernel, tk=tk, k_total=K,
                               resident=resident, mask_last_k=mask_last_k)

    return pl.pallas_call(
        kernel,
        out_shape=jax.ShapeDtypeStruct((N, D), out_dtype),
        grid_spec=pltpu.PrefetchScalarGridSpec(
            num_scalar_prefetch=0,
            grid=(grid_i, grid_k),
            in_specs=[
                # adj streamed exactly once, tile (tm, tk) at block (i, k).
                pl.BlockSpec((tm, tk), lambda i, k: (i, k)),
                emb_spec,
            ],
            # Output block depends only on i -> resident across the k axis.
            out_specs=pl.BlockSpec((tm, D), lambda i, k: (i, 0)),
            scratch_shapes=scratch,
        ),
        compiler_params=pltpu.CompilerParams(
            dimension_semantics=("parallel", "arbitrary"),
            vmem_limit_bytes=vmem_limit,
        ),
        cost_estimate=pl.CostEstimate(
            flops=2 * N * K * D,
            transcendentals=0,
            bytes_accessed=(N * K * adj.dtype.itemsize
                            + K * D * emb_itemsize
                            + N * D * jnp.dtype(out_dtype).itemsize),
        ),
    )(adj, emb_p)


def _make_graph(key, n, d):
    k_adj, k_emb = jax.random.split(key)
    mask = (jax.random.uniform(k_adj, (n, n)) < 0.1).astype(jnp.float32)
    adj = mask + jnp.eye(n, dtype=jnp.float32)        # self loops
    adj = adj / jnp.sum(adj, axis=1, keepdims=True)   # row-normalize
    embeds = jax.random.normal(k_emb, (n, d), dtype=jnp.float32)
    return adj, embeds


if __name__ == "__main__":
    # Test 1: producer-supplied bf16 operands (no wrapper casts/pads at all),
    # resident embeds, single reduction step -> direct out_ref write.
    N, D = 512, 128
    adj_f32, emb_f32 = _make_graph(jax.random.PRNGKey(0), N, D)
    adj_bf, emb_bf = adj_f32.astype(jnp.bfloat16), emb_f32.astype(jnp.bfloat16)

    out = jax.block_until_ready(gcn_layer(adj_bf, emb_bf))
    assert out.shape == (N, D) and out.dtype == jnp.bfloat16
    ref_bf16 = adj_bf.astype(jnp.float32) @ emb_bf.astype(jnp.float32)
    assert jnp.allclose(out.astype(jnp.float32), ref_bf16, atol=2e-2, rtol=2e-2)
    assert jnp.allclose(out.astype(jnp.float32), adj_f32 @ emb_f32,
                        atol=5e-2, rtol=5e-2)

    # Test 2: f32, non-128-multiple N=K=300 -> ragged row block (no N padding),
    # in-kernel masking of the ragged K block, resident embeds.
    adj2, emb2 = _make_graph(jax.random.PRNGKey(1), 300, 128)
    out2 = jax.block_until_ready(gcn_layer(adj2, emb2))
    assert out2.shape == (300, 128)
    assert jnp.allclose(out2, adj2 @ emb2, atol=1e-5, rtol=1e-5)

    # Test 3: force the streamed-embeds fallback + multi-step reduction with
    # the f32 accumulator, ragged last row AND last reduction blocks.
    adj3, emb3 = _make_graph(jax.random.PRNGKey(2), 400, 128)
    out3 = jax.block_until_ready(
        gcn_layer(adj3, emb3, tm=128, tk=128, resident_vmem_budget_bytes=0))
    assert out3.shape == (400, 128)
    assert jnp.allclose(out3, adj3 @ emb3, atol=1e-5, rtol=1e-5)

    print("KERNEL_OK")
</pallas_src>

<mosaic_0001>
module attributes {stable_mosaic.version = 11 : i64} {
  func.func @_spmm_kernel(%arg0: i32, %arg1: i32, %arg2: memref<512x512xbf16, #tpu.memory_space<vmem>>, %arg3: memref<512x128xbf16, #tpu.memory_space<vmem>>, %arg4: memref<512x128xbf16, #tpu.memory_space<vmem>>) attributes {dimension_semantics = [#tpu.dimension_semantics<parallel>, #tpu.dimension_semantics<arbitrary>], iteration_bounds = array<i64: 1, 1>, scalar_prefetch = 0 : i64, scratch_operands = 0 : i64, tpu.core_type = #tpu.core_type<tc>, window_params = [{transform_indices = @transform_0, window_bounds = array<i64: 512, 512>}, {pipeline_mode = #tpu.pipeline_mode<synchronous>, transform_indices = @transform_1, window_bounds = array<i64: 512, 128>}, {transform_indices = @transform_2, window_bounds = array<i64: 512, 128>}]} {
    %c0 = arith.constant 0 : index
    %c0_0 = arith.constant 0 : index
    %0 = vector.load %arg2[%c0, %c0_0] : memref<512x512xbf16, #tpu.memory_space<vmem>>, vector<512x512xbf16>
    %c512_i32 = arith.constant 512 : i32
    %1 = arith.muli %arg1, %c512_i32 : i32
    %2 = tpu.assume_multiple %1, 512 : i32
    %3 = arith.index_cast %2 : i32 to index
    %c0_1 = arith.constant 0 : index
    %4 = vector.load %arg3[%3, %c0_1] : memref<512x128xbf16, #tpu.memory_space<vmem>>, vector<512x128xbf16>
    %cst = arith.constant dense<0.000000e+00> : vector<512x128xf32>
    %5 = tpu.matmul %0, %4, %cst {dimension_numbers = #tpu.dot_dimension_numbers<[1], [0], [0], [1], [0, 0, 1, 1], [], []>} : vector<512x512xbf16>, vector<512x128xbf16>, vector<512x128xf32> -> vector<512x128xf32>
    %6 = arith.truncf %5 : vector<512x128xf32> to vector<512x128xbf16>
    %c0_2 = arith.constant 0 : index
    %c0_3 = arith.constant 0 : index
    %7 = vector.load %arg4[%c0_2, %c0_3] : memref<512x128xbf16, #tpu.memory_space<vmem>>, vector<512x128xbf16>
    tpu.vector_store %arg4[%c0_2, %c0_3], %6 {strides = array<i32>} : memref<512x128xbf16, #tpu.memory_space<vmem>>, vector<512x128xbf16>,
    return
  }
  func.func @transform_0(%arg0: i32, %arg1: i32) -> (i32, i32) {
    %c0_i32 = arith.constant 0 : i32
    return %arg0, %arg1 : i32, i32
  }
  func.func @transform_1(%arg0: i32, %arg1: i32) -> (i32, i32) {
    %c0_i32 = arith.constant 0 : i32
    %c0_i32_0 = arith.constant 0 : i32
    %c0_i32_1 = arith.constant 0 : i32
    return %c0_i32, %c0_i32_0 : i32, i32
  }
  func.func @transform_2(%arg0: i32, %arg1: i32) -> (i32, i32) {
    %c0_i32 = arith.constant 0 : i32
    %c0_i32_0 = arith.constant 0 : i32
    return %arg0, %c0_i32 : i32, i32
  }
}

</mosaic_0001>

<llo_original>
// kernel: tpu_custom_call.1
$region0: #{tpu_custom_call.1}
  #allocation0 [shape = 'u32[]', space=smem, size = 0x4, offset = 0x4, fixed_abs, tag = 'smem constant byte address 0x4 - core index']
  #allocation1 [shape = 'u32[144,128]{1,0:T(1,128)}', space=vmem, size = 0x12000, scoped, tag = 'internal scratch']
  %s0 = inlined_call_operand.hbm [shape: bf16[512,512], index: 0, kind: input, shape index: {}]
  %s1 = inlined_call_operand.hbm [shape: bf16[512,128], index: 1, kind: input, shape index: {}]
  %s2 = inlined_call_operand.hbm [shape: bf16[512,128], index: 2, kind: output, shape index: {}]
  %s3 = sld [smem:[#allocation0]]
  $region26: #{tpu_custom_call.1} parent=0
    _
  %s5 = ssub.s32 1, %s3
  %s6 = scalar_select 0, %s5, %s3
  $region1: #{tpu_custom_call.1} parent=0
    #allocation2 [shape = 'u8[524288]{0}', space=vmem, size = 0x80000, scoped, tag = 'input window, operand 0, single buffered']
    #allocation3 [shape = 's32[1]{0}', space=sflag, size = 0x4, scoped, tag = 'scoped memory for tpu_custom_call.1']
    #allocation4 [shape = 's32[1]{0}', space=sflag, size = 0x4, scoped, tag = 'scoped memory for tpu_custom_call.1']
    #allocation5 [shape = 'u8[131072]{0}', space=vmem, size = 0x20000, scoped, tag = 'input window, operand 1, single buffered']
    #allocation6 [shape = 's32[1]{0}', space=sflag, size = 0x4, scoped, tag = 'scoped memory for tpu_custom_call.1']
    #allocation7 [shape = 'u8[131072]{0}', space=vmem, size = 0x20000, scoped, tag = 'output window, operand 0, single buffered']
    %7 = vsyncpa [#allocation3], 0
    %8 = vsyncpa [#allocation6], 0
    %9 = vsyncpa [#allocation4], 0
    // Predicated region
    $region2: #{tpu_custom_call.1} parent=1 // pred_check
      _
    $region3: #{tpu_custom_call.1} parent=1 // pred_check_branch
      %11 = sbr.rel (0) target = $region5
    $region4: #{tpu_custom_call.1} parent=1 // pred_region
      %s13 = ssub.s32 16384, 16384
      %14 = vsyncadd [#allocation3], %s13
      %s15 = sshll.u32 [#allocation2], 4
      %s16 = int_to_ptr.vmem [resolvable:$true] %s15
      %21 = dma.hbm_to_vmem [thread:$0]  %s0, 16384, %s16, [#allocation3], 256, 256, 16
    $region5: #{tpu_custom_call.1} parent=1 // pred_fallthru
      _
    // Predicated region
    $region6: #{tpu_custom_call.1} parent=1 // pred_check
      _
    $region7: #{tpu_custom_call.1} parent=1 // pred_check_branch
      %23 = sbr.rel (0) target = $region9
    $region8: #{tpu_custom_call.1} parent=1 // pred_region
      %s25 = ssub.s32 4096, 4096
      %26 = vsyncadd [#allocation6], %s25
      %s27 = sshll.u32 [#allocation5], 4
      %s28 = int_to_ptr.vmem [resolvable:$true] %s27
      %33 = dma.hbm_to_vmem [thread:$0]  %s1, 4096, %s28, [#allocation6], 64, 64, 4
    $region9: #{tpu_custom_call.1} parent=1 // pred_fallthru
      _
    // Predicated region
    $region10: #{tpu_custom_call.1} parent=1 // pred_check
      _
    $region11: #{tpu_custom_call.1} parent=1 // pred_check_branch
      %35 = sbr.rel (0) target = $region13
    $region12: #{tpu_custom_call.1} parent=1 // pred_region
      %36 = dma.done [#allocation3], 16384
    $region13: #{tpu_custom_call.1} parent=1 // pred_fallthru
      _
    // Predicated region
    $region14: #{tpu_custom_call.1} parent=1 // pred_check
      _
    $region15: #{tpu_custom_call.1} parent=1 // pred_check_branch
      %38 = sbr.rel (0) target = $region17
    $region16: #{tpu_custom_call.1} parent=1 // pred_region
      %39 = dma.done [#allocation6], 4096
    $region17: #{tpu_custom_call.1} parent=1 // pred_fallthru
      _
    %v41 = vld [vmem:[#allocation2] sm:$0xff]
    %v42 = vld [vmem:[#allocation2 + $0x8] sm:$0xff]
    %v43 = vld [vmem:[#allocation2 + $0x10] sm:$0xff]
    %v44 = vld [vmem:[#allocation2 + $0x18] sm:$0xff]
    %v45 = vld [vmem:[#allocation2 + $0x20] sm:$0xff]
    %v46 = vld [vmem:[#allocation2 + $0x28] sm:$0xff]
    %v47 = vld [vmem:[#allocation2 + $0x30] sm:$0xff]
    %v48 = vld [vmem:[#allocation2 + $0x38] sm:$0xff]
    %v49 = vld [vmem:[#allocation2 + $0x40] sm:$0xff]
    %v50 = vld [vmem:[#allocation2 + $0x48] sm:$0xff]
    %v51 = vld [vmem:[#allocation2 + $0x50] sm:$0xff]
    %v52 = vld [vmem:[#allocation2 + $0x58] sm:$0xff]
    %v53 = vld [vmem:[#allocation2 + $0x60] sm:$0xff]
    %v54 = vld [vmem:[#allocation2 + $0x68] sm:$0xff]
    %v55 = vld [vmem:[#allocation2 + $0x70] sm:$0xff]
    %v56 = vld [vmem:[#allocation2 + $0x78] sm:$0xff]
    %v57 = vld [vmem:[#allocation2 + $0x80] sm:$0xff]
    %v58 = vld [vmem:[#allocation2 + $0x88] sm:$0xff]
    %v59 = vld [vmem:[#allocation2 + $0x90] sm:$0xff]
    %v60 = vld [vmem:[#allocation2 + $0x98] sm:$0xff]
    %v61 = vld [vmem:[#allocation2 + $0xa0] sm:$0xff]
    %v62 = vld [vmem:[#allocation2 + $0xa8] sm:$0xff]
    %v63 = vld [vmem:[#allocation2 + $0xb0] sm:$0xff]
    %v64 = vld [vmem:[#allocation2 + $0xb8] sm:$0xff]
    %v65 = vld [vmem:[#allocation2 + $0xc0] sm:$0xff]
    %v66 = vld [vmem:[#allocation2 + $0xc8] sm:$0xff]
    %v67 = vld [vmem:[#allocation2 + $0xd0] sm:$0xff]
    %v68 = vld [vmem:[#allocation2 + $0xd8] sm:$0xff]
    %v69 = vld [vmem:[#allocation2 + $0xe0] sm:$0xff]
    %v70 = vld [vmem:[#allocation2 + $0xe8] sm:$0xff]
    %v71 = vld [vmem:[#allocation2 + $0xf0] sm:$0xff]
    %v72 = vld [vmem:[#allocation2 + $0xf8] sm:$0xff]
    %v73 = vld [vmem:[#allocation2 + $0x100] sm:$0xff]
    %v74 = vld [vmem:[#allocation2 + $0x108] sm:$0xff]
    %v75 = vld [vmem:[#allocation2 + $0x110] sm:$0xff]
    %v76 = vld [vmem:[#allocation2 + $0x118] sm:$0xff]
    %v77 = vld [vmem:[#allocation2 + $0x120] sm:$0xff]
    %v78 = vld [vmem:[#allocation2 + $0x128] sm:$0xff]
    %v79 = vld [vmem:[#allocation2 + $0x130] sm:$0xff]
    %v80 = vld [vmem:[#allocation2 + $0x138] sm:$0xff]
    %v81 = vld [vmem:[#allocation2 + $0x140] sm:$0xff]
    %v82 = vld [vmem:[#allocation2 + $0x148] sm:$0xff]
    %v83 = vld [vmem:[#allocation2 + $0x150] sm:$0xff]
    %v84 = vld [vmem:[#allocation2 + $0x158] sm:$0xff]
    %v85 = vld [vmem:[#allocation2 + $0x160] sm:$0xff]
    %v86 = vld [vmem:[#allocation2 + $0x168] sm:$0xff]
    %v87 = vld [vmem:[#allocation2 + $0x170] sm:$0xff]
    %v88 = vld [vmem:[#allocation2 + $0x178] sm:$0xff]
    %v89 = vld [vmem:[#allocation2 + $0x180] sm:$0xff]
    %v90 = vld [vmem:[#allocation2 + $0x188] sm:$0xff]
    %v91 = vld [vmem:[#allocation2 + $0x190] sm:$0xff]
    %v92 = vld [vmem:[#allocation2 + $0x198] sm:$0xff]
    %v93 = vld [vmem:[#allocation2 + $0x1a0] sm:$0xff]
    %v94 = vld [vmem:[#allocation2 + $0x1a8] sm:$0xff]
    %v95 = vld [vmem:[#allocation2 + $0x1b0] sm:$0xff]
    %v96 = vld [vmem:[#allocation2 + $0x1b8] sm:$0xff]
    %v97 = vld [vmem:[#allocation2 + $0x1c0] sm:$0xff]
    %v98 = vld [vmem:[#allocation2 + $0x1c8] sm:$0xff]
    %v99 = vld [vmem:[#allocation2 + $0x1d0] sm:$0xff]
    %v100 = vld [vmem:[#allocation2 + $0x1d8] sm:$0xff]
    %v101 = vld [vmem:[#allocation2 + $0x1e0] sm:$0xff]
    %v102 = vld [vmem:[#allocation2 + $0x1e8] sm:$0xff]
    %v103 = vld [vmem:[#allocation2 + $0x1f0] sm:$0xff]
    %v104 = vld [vmem:[#allocation2 + $0x1f8] sm:$0xff]
    %v105 = vld [vmem:[#allocation2 + $0x200] sm:$0xff]
    %v106 = vld [vmem:[#allocation2 + $0x208] sm:$0xff]
    %v107 = vld [vmem:[#allocation2 + $0x210] sm:$0xff]
    %v108 = vld [vmem:[#allocation2 + $0x218] sm:$0xff]
    %v109 = vld [vmem:[#allocation2 + $0x220] sm:$0xff]
    %v110 = vld [vmem:[#allocation2 + $0x228] sm:$0xff]
    %v111 = vld [vmem:[#allocation2 + $0x230] sm:$0xff]
    %v112 = vld [vmem:[#allocation2 + $0x238] sm:$0xff]
    %v113 = vld [vmem:[#allocation2 + $0x240] sm:$0xff]
    %v114 = vld [vmem:[#allocation2 + $0x248] sm:$0xff]
    %v115 = vld [vmem:[#allocation2 + $0x250] sm:$0xff]
    %v116 = vld [vmem:[#allocation2 + $0x258] sm:$0xff]
    %v117 = vld [vmem:[#allocation2 + $0x260] sm:$0xff]
    %v118 = vld [vmem:[#allocation2 + $0x268] sm:$0xff]
    %v119 = vld [vmem:[#allocation2 + $0x270] sm:$0xff]
    %v120 = vld [vmem:[#allocation2 + $0x278] sm:$0xff]
    %v121 = vld [vmem:[#allocation2 + $0x280] sm:$0xff]
    %v122 = vld [vmem:[#allocation2 + $0x288] sm:$0xff]
    %v123 = vld [vmem:[#allocation2 + $0x290] sm:$0xff]
    %v124 = vld [vmem:[#allocation2 + $0x298] sm:$0xff]
    %v125 = vld [vmem:[#allocation2 + $0x2a0] sm:$0xff]
    %v126 = vld [vmem:[#allocation2 + $0x2a8] sm:$0xff]
    %v127 = vld [vmem:[#allocation2 + $0x2b0] sm:$0xff]
    %v128 = vld [vmem:[#allocation2 + $0x2b8] sm:$0xff]
    %v129 = vld [vmem:[#allocation2 + $0x2c0] sm:$0xff]
    %v130 = vld [vmem:[#allocation2 + $0x2c8] sm:$0xff]
    %v131 = vld [vmem:[#allocation2 + $0x2d0] sm:$0xff]
    %v132 = vld [vmem:[#allocation2 + $0x2d8] sm:$0xff]
    %v133 = vld [vmem:[#allocation2 + $0x2e0] sm:$0xff]
    %v134 = vld [vmem:[#allocation2 + $0x2e8] sm:$0xff]
    %v135 = vld [vmem:[#allocation2 + $0x2f0] sm:$0xff]
    %v136 = vld [vmem:[#allocation2 + $0x2f8] sm:$0xff]
    %v137 = vld [vmem:[#allocation2 + $0x300] sm:$0xff]
    %v138 = vld [vmem:[#allocation2 + $0x308] sm:$0xff]
    %v139 = vld [vmem:[#allocation2 + $0x310] sm:$0xff]
    %v140 = vld [vmem:[#allocation2 + $0x318] sm:$0xff]
    %v141 = vld [vmem:[#allocation2 + $0x320] sm:$0xff]
    %v142 = vld [vmem:[#allocation2 + $0x328] sm:$0xff]
    %v143 = vld [vmem:[#allocation2 + $0x330] sm:$0xff]
    %v144 = vld [vmem:[#allocation2 + $0x338] sm:$0xff]
    %v145 = vld [vmem:[#allocation2 + $0x340] sm:$0xff]
    %v146 = vld [vmem:[#allocation2 + $0x348] sm:$0xff]
    %v147 = vld [vmem:[#allocation2 + $0x350] sm:$0xff]
    %v148 = vld [vmem:[#allocation2 + $0x358] sm:$0xff]
    %v149 = vld [vmem:[#allocation2 + $0x360] sm:$0xff]
    %v150 = vld [vmem:[#allocation2 + $0x368] sm:$0xff]
    %v151 = vld [vmem:[#allocation2 + $0x370] sm:$0xff]
    %v152 = vld [vmem:[#allocation2 + $0x378] sm:$0xff]
    %v153 = vld [vmem:[#allocation2 + $0x380] sm:$0xff]
    %v154 = vld [vmem:[#allocation2 + $0x388] sm:$0xff]
    %v155 = vld [vmem:[#allocation2 + $0x390] sm:$0xff]
    %v156 = vld [vmem:[#allocation2 + $0x398] sm:$0xff]
    %v157 = vld [vmem:[#allocation2 + $0x3a0] sm:$0xff]
    %v158 = vld [vmem:[#allocation2 + $0x3a8] sm:$0xff]
    %v159 = vld [vmem:[#allocation2 + $0x3b0] sm:$0xff]
    %v160 = vld [vmem:[#allocation2 + $0x3b8] sm:$0xff]
    %v161 = vld [vmem:[#allocation2 + $0x3c0] sm:$0xff]
    %v162 = vld [vmem:[#allocation2 + $0x3c8] sm:$0xff]
    %v163 = vld [vmem:[#allocation2 + $0x3d0] sm:$0xff]
    %v164 = vld [vmem:[#allocation2 + $0x3d8] sm:$0xff]
    %v165 = vld [vmem:[#allocation2 + $0x3e0] sm:$0xff]
    %v166 = vld [vmem:[#allocation2 + $0x3e8] sm:$0xff]
    %v167 = vld [vmem:[#allocation2 + $0x3f0] sm:$0xff]
    %v168 = vld [vmem:[#allocation2 + $0x3f8] sm:$0xff]
    %s169 = smul.u32 0, 512
    %s170 = sshra.s32 %s169, 3
    %s171 = sand.u32 %s169, 7
    %s172 = smul.addr %s170, 4
    %s173 = scalar_lea.vmem [#allocation5], %s172
    %v174 = vld [vmem:[%s173] sm:$0xf]
    %v175 = vld [vmem:[%s173 + $0x4] sm:$0xf]
    %v176 = vld [vmem:[%s173 + $0x8] sm:$0xf]
    %v177 = vld [vmem:[%s173 + $0xc] sm:$0xf]
    %v178 = vld [vmem:[%s173 + $0x10] sm:$0xf]
    %v179 = vld [vmem:[%s173 + $0x14] sm:$0xf]
    %v180 = vld [vmem:[%s173 + $0x18] sm:$0xf]
    %v181 = vld [vmem:[%s173 + $0x1c] sm:$0xf]
    %v182 = vld [vmem:[%s173 + $0x20] sm:$0xf]
    %v183 = vld [vmem:[%s173 + $0x24] sm:$0xf]
    %v184 = vld [vmem:[%s173 + $0x28] sm:$0xf]
    %v185 = vld [vmem:[%s173 + $0x2c] sm:$0xf]
    %v186 = vld [vmem:[%s173 + $0x30] sm:$0xf]
    %v187 = vld [vmem:[%s173 + $0x34] sm:$0xf]
    %v188 = vld [vmem:[%s173 + $0x38] sm:$0xf]
    %v189 = vld [vmem:[%s173 + $0x3c] sm:$0xf]
    %v190 = vld [vmem:[%s173 + $0x40] sm:$0xf]
    %v191 = vld [vmem:[%s173 + $0x44] sm:$0xf]
    %v192 = vld [vmem:[%s173 + $0x48] sm:$0xf]
    %v193 = vld [vmem:[%s173 + $0x4c] sm:$0xf]
    %v194 = vld [vmem:[%s173 + $0x50] sm:$0xf]
    %v195 = vld [vmem:[%s173 + $0x54] sm:$0xf]
    %v196 = vld [vmem:[%s173 + $0x58] sm:$0xf]
    %v197 = vld [vmem:[%s173 + $0x5c] sm:$0xf]
    %v198 = vld [vmem:[%s173 + $0x60] sm:$0xf]
    %v199 = vld [vmem:[%s173 + $0x64] sm:$0xf]
    %v200 = vld [vmem:[%s173 + $0x68] sm:$0xf]
    %v201 = vld [vmem:[%s173 + $0x6c] sm:$0xf]
    %v202 = vld [vmem:[%s173 + $0x70] sm:$0xf]
    %v203 = vld [vmem:[%s173 + $0x74] sm:$0xf]
    %v204 = vld [vmem:[%s173 + $0x78] sm:$0xf]
    %v205 = vld [vmem:[%s173 + $0x7c] sm:$0xf]
    %v206 = vld [vmem:[%s173 + $0x80] sm:$0xf]
    %v207 = vld [vmem:[%s173 + $0x84] sm:$0xf]
    %v208 = vld [vmem:[%s173 + $0x88] sm:$0xf]
    %v209 = vld [vmem:[%s173 + $0x8c] sm:$0xf]
    %v210 = vld [vmem:[%s173 + $0x90] sm:$0xf]
    %v211 = vld [vmem:[%s173 + $0x94] sm:$0xf]
    %v212 = vld [vmem:[%s173 + $0x98] sm:$0xf]
    %v213 = vld [vmem:[%s173 + $0x9c] sm:$0xf]
    %v214 = vld [vmem:[%s173 + $0xa0] sm:$0xf]
    %v215 = vld [vmem:[%s173 + $0xa4] sm:$0xf]
    %v216 = vld [vmem:[%s173 + $0xa8] sm:$0xf]
    %v217 = vld [vmem:[%s173 + $0xac] sm:$0xf]
    %v218 = vld [vmem:[%s173 + $0xb0] sm:$0xf]
    %v219 = vld [vmem:[%s173 + $0xb4] sm:$0xf]
    %v220 = vld [vmem:[%s173 + $0xb8] sm:$0xf]
    %v221 = vld [vmem:[%s173 + $0xbc] sm:$0xf]
    %v222 = vld [vmem:[%s173 + $0xc0] sm:$0xf]
    %v223 = vld [vmem:[%s173 + $0xc4] sm:$0xf]
    %v224 = vld [vmem:[%s173 + $0xc8] sm:$0xf]
    %v225 = vld [vmem:[%s173 + $0xcc] sm:$0xf]
    %v226 = vld [vmem:[%s173 + $0xd0] sm:$0xf]
    %v227 = vld [vmem:[%s173 + $0xd4] sm:$0xf]
    %v228 = vld [vmem:[%s173 + $0xd8] sm:$0xf]
    %v229 = vld [vmem:[%s173 + $0xdc] sm:$0xf]
    %v230 = vld [vmem:[%s173 + $0xe0] sm:$0xf]
    %v231 = vld [vmem:[%s173 + $0xe4] sm:$0xf]
    %v232 = vld [vmem:[%s173 + $0xe8] sm:$0xf]
    %v233 = vld [vmem:[%s173 + $0xec] sm:$0xf]
    %v234 = vld [vmem:[%s173 + $0xf0] sm:$0xf]
    %v235 = vld [vmem:[%s173 + $0xf4] sm:$0xf]
    %v236 = vld [vmem:[%s173 + $0xf8] sm:$0xf]
    %v237 = vld [vmem:[%s173 + $0xfc] sm:$0xf]
    %v366 = vunpack.c.l.b16 %v41
    %v367 = vunpack.c.h.b16 %v41
    %v368 = vunpack.c.l.b16 %v42
    %v369 = vunpack.c.h.b16 %v42
    %v370 = vunpack.c.l.b16 %v43
    %v371 = vunpack.c.h.b16 %v43
    %v372 = vunpack.c.l.b16 %v44
    %v373 = vunpack.c.h.b16 %v44
    %v374 = vunpack.c.l.b16 %v45
    %v375 = vunpack.c.h.b16 %v45
    %v376 = vunpack.c.l.b16 %v46
    %v377 = vunpack.c.h.b16 %v46
    %v378 = vunpack.c.l.b16 %v47
    %v379 = vunpack.c.h.b16 %v47
    %v380 = vunpack.c.l.b16 %v48
    %v381 = vunpack.c.h.b16 %v48
    %v382 = vunpack.c.l.b16 %v49
    %v383 = vunpack.c.h.b16 %v49
    %v384 = vunpack.c.l.b16 %v50
    %v385 = vunpack.c.h.b16 %v50
    %v386 = vunpack.c.l.b16 %v51
    %v387 = vunpack.c.h.b16 %v51
    %v388 = vunpack.c.l.b16 %v52
    %v389 = vunpack.c.h.b16 %v52
    %v390 = vunpack.c.l.b16 %v53
    %v391 = vunpack.c.h.b16 %v53
    %v392 = vunpack.c.l.b16 %v54
    %v393 = vunpack.c.h.b16 %v54
    %v394 = vunpack.c.l.b16 %v55
    %v395 = vunpack.c.h.b16 %v55
    %v396 = vunpack.c.l.b16 %v56
    %v397 = vunpack.c.h.b16 %v56
    %v398 = vunpack.c.l.b16 %v57
    %v399 = vunpack.c.h.b16 %v57
    %v400 = vunpack.c.l.b16 %v58
    %v401 = vunpack.c.h.b16 %v58
    %v402 = vunpack.c.l.b16 %v59
    %v403 = vunpack.c.h.b16 %v59
    %v404 = vunpack.c.l.b16 %v60
    %v405 = vunpack.c.h.b16 %v60
    %v406 = vunpack.c.l.b16 %v61
    %v407 = vunpack.c.h.b16 %v61
    %v408 = vunpack.c.l.b16 %v62
    %v409 = vunpack.c.h.b16 %v62
    %v410 = vunpack.c.l.b16 %v63
    %v411 = vunpack.c.h.b16 %v63
    %v412 = vunpack.c.l.b16 %v64
    %v413 = vunpack.c.h.b16 %v64
    %v414 = vunpack.c.l.b16 %v65
    %v415 = vunpack.c.h.b16 %v65
    %v416 = vunpack.c.l.b16 %v66
    %v417 = vunpack.c.h.b16 %v66
    %v418 = vunpack.c.l.b16 %v67
    %v419 = vunpack.c.h.b16 %v67
    %v420 = vunpack.c.l.b16 %v68
    %v421 = vunpack.c.h.b16 %v68
    %v422 = vunpack.c.l.b16 %v69
    %v423 = vunpack.c.h.b16 %v69
    %v424 = vunpack.c.l.b16 %v70
    %v425 = vunpack.c.h.b16 %v70
    %v426 = vunpack.c.l.b16 %v71
    %v427 = vunpack.c.h.b16 %v71
    %v428 = vunpack.c.l.b16 %v72
    %v429 = vunpack.c.h.b16 %v72
    %v430 = vunpack.c.l.b16 %v73
    %v431 = vunpack.c.h.b16 %v73
    %v432 = vunpack.c.l.b16 %v74
    %v433 = vunpack.c.h.b16 %v74
    %v434 = vunpack.c.l.b16 %v75
    %v435 = vunpack.c.h.b16 %v75
    %v436 = vunpack.c.l.b16 %v76
    %v437 = vunpack.c.h.b16 %v76
    %v438 = vunpack.c.l.b16 %v77
    %v439 = vunpack.c.h.b16 %v77
    %v440 = vunpack.c.l.b16 %v78
    %v441 = vunpack.c.h.b16 %v78
    %v442 = vunpack.c.l.b16 %v79
    %v443 = vunpack.c.h.b16 %v79
    %v444 = vunpack.c.l.b16 %v80
    %v445 = vunpack.c.h.b16 %v80
    %v446 = vunpack.c.l.b16 %v81
    %v447 = vunpack.c.h.b16 %v81
    %v448 = vunpack.c.l.b16 %v82
    %v449 = vunpack.c.h.b16 %v82
    %v450 = vunpack.c.l.b16 %v83
    %v451 = vunpack.c.h.b16 %v83
    %v452 = vunpack.c.l.b16 %v84
    %v453 = vunpack.c.h.b16 %v84
    %v454 = vunpack.c.l.b16 %v85
    %v455 = vunpack.c.h.b16 %v85
    %v456 = vunpack.c.l.b16 %v86
    %v457 = vunpack.c.h.b16 %v86
    %v458 = vunpack.c.l.b16 %v87
    %v459 = vunpack.c.h.b16 %v87
    %v460 = vunpack.c.l.b16 %v88
    %v461 = vunpack.c.h.b16 %v88
    %v462 = vunpack.c.l.b16 %v89
    %v463 = vunpack.c.h.b16 %v89
    %v464 = vunpack.c.l.b16 %v90
    %v465 = vunpack.c.h.b16 %v90
    %v466 = vunpack.c.l.b16 %v91
    %v467 = vunpack.c.h.b16 %v91
    %v468 = vunpack.c.l.b16 %v92
    %v469 = vunpack.c.h.b16 %v92
    %v470 = vunpack.c.l.b16 %v93
    %v471 = vunpack.c.h.b16 %v93
    %v472 = vunpack.c.l.b16 %v94
    %v473 = vunpack.c.h.b16 %v94
    %v474 = vunpack.c.l.b16 %v95
    %v475 = vunpack.c.h.b16 %v95
    %v476 = vunpack.c.l.b16 %v96
    %v477 = vunpack.c.h.b16 %v96
    %v478 = vunpack.c.l.b16 %v97
    %v479 = vunpack.c.h.b16 %v97
    %v480 = vunpack.c.l.b16 %v98
    %v481 = vunpack.c.h.b16 %v98
    %v482 = vunpack.c.l.b16 %v99
    %v483 = vunpack.c.h.b16 %v99
    %v484 = vunpack.c.l.b16 %v100
    %v485 = vunpack.c.h.b16 %v100
    %v486 = vunpack.c.l.b16 %v101
    %v487 = vunpack.c.h.b16 %v101
    %v488 = vunpack.c.l.b16 %v102
    %v489 = vunpack.c.h.b16 %v102
    %v490 = vunpack.c.l.b16 %v103
    %v491 = vunpack.c.h.b16 %v103
    %v492 = vunpack.c.l.b16 %v104
    %v493 = vunpack.c.h.b16 %v104
    %v494 = vunpack.c.l.b16 %v105
    %v495 = vunpack.c.h.b16 %v105
    %v496 = vunpack.c.l.b16 %v106
    %v497 = vunpack.c.h.b16 %v106
    %v498 = vunpack.c.l.b16 %v107
    %v499 = vunpack.c.h.b16 %v107
    %v500 = vunpack.c.l.b16 %v108
    %v501 = vunpack.c.h.b16 %v108
    %v502 = vunpack.c.l.b16 %v109
    %v503 = vunpack.c.h.b16 %v109
    %v504 = vunpack.c.l.b16 %v110
    %v505 = vunpack.c.h.b16 %v110
    %v506 = vunpack.c.l.b16 %v111
    %v507 = vunpack.c.h.b16 %v111
    %v508 = vunpack.c.l.b16 %v112
    %v509 = vunpack.c.h.b16 %v112
    %v510 = vunpack.c.l.b16 %v113
    %v511 = vunpack.c.h.b16 %v113
    %v512 = vunpack.c.l.b16 %v114
    %v513 = vunpack.c.h.b16 %v114
    %v514 = vunpack.c.l.b16 %v115
    %v515 = vunpack.c.h.b16 %v115
    %v516 = vunpack.c.l.b16 %v116
    %v517 = vunpack.c.h.b16 %v116
    %v518 = vunpack.c.l.b16 %v117
    %v519 = vunpack.c.h.b16 %v117
    %v520 = vunpack.c.l.b16 %v118
    %v521 = vunpack.c.h.b16 %v118
    %v522 = vunpack.c.l.b16 %v119
    %v523 = vunpack.c.h.b16 %v119
    %v524 = vunpack.c.l.b16 %v120
    %v525 = vunpack.c.h.b16 %v120
    %v526 = vunpack.c.l.b16 %v121
    %v527 = vunpack.c.h.b16 %v121
    %v528 = vunpack.c.l.b16 %v122
    %v529 = vunpack.c.h.b16 %v122
    %v530 = vunpack.c.l.b16 %v123
    %v531 = vunpack.c.h.b16 %v123
    %v532 = vunpack.c.l.b16 %v124
    %v533 = vunpack.c.h.b16 %v124
    %v534 = vunpack.c.l.b16 %v125
    %v535 = vunpack.c.h.b16 %v125
    %v536 = vunpack.c.l.b16 %v126
    %v537 = vunpack.c.h.b16 %v126
    %v538 = vunpack.c.l.b16 %v127
    %v539 = vunpack.c.h.b16 %v127
    %v540 = vunpack.c.l.b16 %v128
    %v541 = vunpack.c.h.b16 %v128
    %v542 = vunpack.c.l.b16 %v129
    %v543 = vunpack.c.h.b16 %v129
    %v544 = vunpack.c.l.b16 %v130
    %v545 = vunpack.c.h.b16 %v130
    %v546 = vunpack.c.l.b16 %v131
    %v547 = vunpack.c.h.b16 %v131
    %v548 = vunpack.c.l.b16 %v132
    %v549 = vunpack.c.h.b16 %v132
    %v550 = vunpack.c.l.b16 %v133
    %v551 = vunpack.c.h.b16 %v133
    %v552 = vunpack.c.l.b16 %v134
    %v553 = vunpack.c.h.b16 %v134
    %v554 = vunpack.c.l.b16 %v135
    %v555 = vunpack.c.h.b16 %v135
    %v556 = vunpack.c.l.b16 %v136
    %v557 = vunpack.c.h.b16 %v136
    %v558 = vunpack.c.l.b16 %v137
    %v559 = vunpack.c.h.b16 %v137
    %v560 = vunpack.c.l.b16 %v138
    %v561 = vunpack.c.h.b16 %v138
    %v562 = vunpack.c.l.b16 %v139
    %v563 = vunpack.c.h.b16 %v139
    %v564 = vunpack.c.l.b16 %v140
    %v565 = vunpack.c.h.b16 %v140
    %v566 = vunpack.c.l.b16 %v141
    %v567 = vunpack.c.h.b16 %v141
    %v568 = vunpack.c.l.b16 %v142
    %v569 = vunpack.c.h.b16 %v142
    %v570 = vunpack.c.l.b16 %v143
    %v571 = vunpack.c.h.b16 %v143
    %v572 = vunpack.c.l.b16 %v144
    %v573 = vunpack.c.h.b16 %v144
    %v574 = vunpack.c.l.b16 %v145
    %v575 = vunpack.c.h.b16 %v145
    %v576 = vunpack.c.l.b16 %v146
    %v577 = vunpack.c.h.b16 %v146
    %v578 = vunpack.c.l.b16 %v147
    %v579 = vunpack.c.h.b16 %v147
    %v580 = vunpack.c.l.b16 %v148
    %v581 = vunpack.c.h.b16 %v148
    %v582 = vunpack.c.l.b16 %v149
    %v583 = vunpack.c.h.b16 %v149
    %v584 = vunpack.c.l.b16 %v150
    %v585 = vunpack.c.h.b16 %v150
    %v586 = vunpack.c.l.b16 %v151
    %v587 = vunpack.c.h.b16 %v151
    %v588 = vunpack.c.l.b16 %v152
    %v589 = vunpack.c.h.b16 %v152
    %v590 = vunpack.c.l.b16 %v153
    %v591 = vunpack.c.h.b16 %v153
    %v592 = vunpack.c.l.b16 %v154
    %v593 = vunpack.c.h.b16 %v154
    %v594 = vunpack.c.l.b16 %v155
    %v595 = vunpack.c.h.b16 %v155
    %v596 = vunpack.c.l.b16 %v156
    %v597 = vunpack.c.h.b16 %v156
    %v598 = vunpack.c.l.b16 %v157
    %v599 = vunpack.c.h.b16 %v157
    %v600 = vunpack.c.l.b16 %v158
    %v601 = vunpack.c.h.b16 %v158
    %v602 = vunpack.c.l.b16 %v159
    %v603 = vunpack.c.h.b16 %v159
    %v604 = vunpack.c.l.b16 %v160
    %v605 = vunpack.c.h.b16 %v160
    %v606 = vunpack.c.l.b16 %v161
    %v607 = vunpack.c.h.b16 %v161
    %v608 = vunpack.c.l.b16 %v162
    %v609 = vunpack.c.h.b16 %v162
    %v610 = vunpack.c.l.b16 %v163
    %v611 = vunpack.c.h.b16 %v163
    %v612 = vunpack.c.l.b16 %v164
    %v613 = vunpack.c.h.b16 %v164
    %v614 = vunpack.c.l.b16 %v165
    %v615 = vunpack.c.h.b16 %v165
    %v616 = vunpack.c.l.b16 %v166
    %v617 = vunpack.c.h.b16 %v166
    %v618 = vunpack.c.l.b16 %v167
    %v619 = vunpack.c.h.b16 %v167
    %v620 = vunpack.c.l.b16 %v168
    %v621 = vunpack.c.h.b16 %v168
    %v622 = vpack.c.b16 %v370, %v366
    %v623 = vpack.c.b16 %v371, %v367
    %v624 = vpack.c.b16 %v372, %v368
    %v625 = vpack.c.b16 %v373, %v369
    %v626 = vpack.c.b16 %v378, %v374
    %v627 = vpack.c.b16 %v379, %v375
    %v628 = vpack.c.b16 %v380, %v376
    %v629 = vpack.c.b16 %v381, %v377
    %v630 = vpack.c.b16 %v386, %v382
    %v631 = vpack.c.b16 %v387, %v383
    %v632 = vpack.c.b16 %v388, %v384
    %v633 = vpack.c.b16 %v389, %v385
    %v634 = vpack.c.b16 %v394, %v390
    %v635 = vpack.c.b16 %v395, %v391
    %v636 = vpack.c.b16 %v396, %v392
    %v637 = vpack.c.b16 %v397, %v393
    %v638 = vpack.c.b16 %v402, %v398
    %v639 = vpack.c.b16 %v403, %v399
    %v640 = vpack.c.b16 %v404, %v400
    %v641 = vpack.c.b16 %v405, %v401
    %v642 = vpack.c.b16 %v410, %v406
    %v643 = vpack.c.b16 %v411, %v407
    %v644 = vpack.c.b16 %v412, %v408
    %v645 = vpack.c.b16 %v413, %v409
    %v646 = vpack.c.b16 %v418, %v414
    %v647 = vpack.c.b16 %v419, %v415
    %v648 = vpack.c.b16 %v420, %v416
    %v649 = vpack.c.b16 %v421, %v417
    %v650 = vpack.c.b16 %v426, %v422
    %v651 = vpack.c.b16 %v427, %v423
    %v652 = vpack.c.b16 %v428, %v424
    %v653 = vpack.c.b16 %v429, %v425
    %v654 = vpack.c.b16 %v434, %v430
    %v655 = vpack.c.b16 %v435, %v431
    %v656 = vpack.c.b16 %v436, %v432
    %v657 = vpack.c.b16 %v437, %v433
    %v658 = vpack.c.b16 %v442, %v438
    %v659 = vpack.c.b16 %v443, %v439
    %v660 = vpack.c.b16 %v444, %v440
    %v661 = vpack.c.b16 %v445, %v441
    %v662 = vpack.c.b16 %v450, %v446
    %v663 = vpack.c.b16 %v451, %v447
    %v664 = vpack.c.b16 %v452, %v448
    %v665 = vpack.c.b16 %v453, %v449
    %v666 = vpack.c.b16 %v458, %v454
    %v667 = vpack.c.b16 %v459, %v455
    %v668 = vpack.c.b16 %v460, %v456
    %v669 = vpack.c.b16 %v461, %v457
    %v670 = vpack.c.b16 %v466, %v462
    %v671 = vpack.c.b16 %v467, %v463
    %v672 = vpack.c.b16 %v468, %v464
    %v673 = vpack.c.b16 %v469, %v465
    %v674 = vpack.c.b16 %v474, %v470
    %v675 = vpack.c.b16 %v475, %v471
    %v676 = vpack.c.b16 %v476, %v472
    %v677 = vpack.c.b16 %v477, %v473
    %v678 = vpack.c.b16 %v482, %v478
    %v679 = vpack.c.b16 %v483, %v479
    %v680 = vpack.c.b16 %v484, %v480
    %v681 = vpack.c.b16 %v485, %v481
    %v682 = vpack.c.b16 %v490, %v486
    %v683 = vpack.c.b16 %v491, %v487
    %v684 = vpack.c.b16 %v492, %v488
    %v685 = vpack.c.b16 %v493, %v489
    %v686 = vpack.c.b16 %v498, %v494
    %v687 = vpack.c.b16 %v499, %v495
    %v688 = vpack.c.b16 %v500, %v496
    %v689 = vpack.c.b16 %v501, %v497
    %v690 = vpack.c.b16 %v506, %v502
    %v691 = vpack.c.b16 %v507, %v503
    %v692 = vpack.c.b16 %v508, %v504
    %v693 = vpack.c.b16 %v509, %v505
    %v694 = vpack.c.b16 %v514, %v510
    %v695 = vpack.c.b16 %v515, %v511
    %v696 = vpack.c.b16 %v516, %v512
    %v697 = vpack.c.b16 %v517, %v513
    %v698 = vpack.c.b16 %v522, %v518
    %v699 = vpack.c.b16 %v523, %v519
    %v700 = vpack.c.b16 %v524, %v520
    %v701 = vpack.c.b16 %v525, %v521
    %v702 = vpack.c.b16 %v530, %v526
    %v703 = vpack.c.b16 %v531, %v527
    %v704 = vpack.c.b16 %v532, %v528
    %v705 = vpack.c.b16 %v533, %v529
    %v706 = vpack.c.b16 %v538, %v534
    %v707 = vpack.c.b16 %v539, %v535
    %v708 = vpack.c.b16 %v540, %v536
    %v709 = vpack.c.b16 %v541, %v537
    %v710 = vpack.c.b16 %v546, %v542
    %v711 = vpack.c.b16 %v547, %v543
    %v712 = vpack.c.b16 %v548, %v544
    %v713 = vpack.c.b16 %v549, %v545
    %v714 = vpack.c.b16 %v554, %v550
    %v715 = vpack.c.b16 %v555, %v551
    %v716 = vpack.c.b16 %v556, %v552
    %v717 = vpack.c.b16 %v557, %v553
    %v718 = vpack.c.b16 %v562, %v558
    %v719 = vpack.c.b16 %v563, %v559
    %v720 = vpack.c.b16 %v564, %v560
    %v721 = vpack.c.b16 %v565, %v561
    %v722 = vpack.c.b16 %v570, %v566
    %v723 = vpack.c.b16 %v571, %v567
    %v724 = vpack.c.b16 %v572, %v568
    %v725 = vpack.c.b16 %v573, %v569
    %v726 = vpack.c.b16 %v578, %v574
    %v727 = vpack.c.b16 %v579, %v575
    %v728 = vpack.c.b16 %v580, %v576
    %v729 = vpack.c.b16 %v581, %v577
    %v730 = vpack.c.b16 %v586, %v582
    %v731 = vpack.c.b16 %v587, %v583
    %v732 = vpack.c.b16 %v588, %v584
    %v733 = vpack.c.b16 %v589, %v585
    %v734 = vpack.c.b16 %v594, %v590
    %v735 = vpack.c.b16 %v595, %v591
    %v736 = vpack.c.b16 %v596, %v592
    %v737 = vpack.c.b16 %v597, %v593
    %v738 = vpack.c.b16 %v602, %v598
    %v739 = vpack.c.b16 %v603, %v599
    %v740 = vpack.c.b16 %v604, %v600
    %v741 = vpack.c.b16 %v605, %v601
    %v742 = vpack.c.b16 %v610, %v606
    %v743 = vpack.c.b16 %v611, %v607
    %v744 = vpack.c.b16 %v612, %v608
    %v745 = vpack.c.b16 %v613, %v609
    %v746 = vpack.c.b16 %v618, %v614
    %v747 = vpack.c.b16 %v619, %v615
    %v748 = vpack.c.b16 %v620, %v616
    %v749 = vpack.c.b16 %v621, %v617
    %v942 = vunpack.c.l.b16 %v174
    %v943 = vunpack.c.l.b16 %v175
    %v944 = vunpack.c.l.b16 %v176
    %v945 = vunpack.c.l.b16 %v177
    %v946 = vunpack.c.l.b16 %v178
    %v947 = vunpack.c.l.b16 %v179
    %v948 = vunpack.c.l.b16 %v180
    %v949 = vunpack.c.l.b16 %v181
    %v950 = vunpack.c.l.b16 %v182
    %v951 = vunpack.c.l.b16 %v183
    %v952 = vunpack.c.l.b16 %v184
    %v953 = vunpack.c.l.b16 %v185
    %v954 = vunpack.c.l.b16 %v186
    %v955 = vunpack.c.l.b16 %v187
    %v956 = vunpack.c.l.b16 %v188
    %v957 = vunpack.c.l.b16 %v189
    %v958 = vunpack.c.l.b16 %v190
    %v959 = vunpack.c.l.b16 %v191
    %v960 = vunpack.c.l.b16 %v192
    %v961 = vunpack.c.l.b16 %v193
    %v962 = vunpack.c.l.b16 %v194
    %v963 = vunpack.c.l.b16 %v195
    %v964 = vunpack.c.l.b16 %v196
    %v965 = vunpack.c.l.b16 %v197
    %v966 = vunpack.c.l.b16 %v198
    %v967 = vunpack.c.l.b16 %v199
    %v968 = vunpack.c.l.b16 %v200
    %v969 = vunpack.c.l.b16 %v201
    %v970 = vunpack.c.l.b16 %v202
    %v971 = vunpack.c.l.b16 %v203
    %v972 = vunpack.c.l.b16 %v204
    %v973 = vunpack.c.l.b16 %v205
    %v974 = vunpack.c.l.b16 %v206
    %v975 = vunpack.c.l.b16 %v207
    %v976 = vunpack.c.l.b16 %v208
    %v977 = vunpack.c.l.b16 %v209
    %v978 = vunpack.c.l.b16 %v210
    %v979 = vunpack.c.l.b16 %v211
    %v980 = vunpack.c.l.b16 %v212
    %v981 = vunpack.c.l.b16 %v213
    %v982 = vunpack.c.l.b16 %v214
    %v983 = vunpack.c.l.b16 %v215
    %v984 = vunpack.c.l.b16 %v216
    %v985 = vunpack.c.l.b16 %v217
    %v986 = vunpack.c.l.b16 %v218
    %v987 = vunpack.c.l.b16 %v219
    %v988 = vunpack.c.l.b16 %v220
    %v989 = vunpack.c.l.b16 %v221
    %v990 = vunpack.c.l.b16 %v222
    %v991 = vunpack.c.l.b16 %v223
    %v992 = vunpack.c.l.b16 %v224
    %v993 = vunpack.c.l.b16 %v225
    %v994 = vunpack.c.l.b16 %v226
    %v995 = vunpack.c.l.b16 %v227
    %v996 = vunpack.c.l.b16 %v228
    %v997 = vunpack.c.l.b16 %v229
    %v998 = vunpack.c.l.b16 %v230
    %v999 = vunpack.c.l.b16 %v231
    %v1000 = vunpack.c.l.b16 %v232
    %v1001 = vunpack.c.l.b16 %v233
    %v1002 = vunpack.c.l.b16 %v234
    %v1003 = vunpack.c.l.b16 %v235
    %v1004 = vunpack.c.l.b16 %v236
    %v1005 = vunpack.c.l.b16 %v237
    %v1006 = vpack.c.b16 %v943, %v942
    %v1007 = vpack.c.b16 %v945, %v944
    %v1008 = vpack.c.b16 %v947, %v946
    %v1009 = vpack.c.b16 %v949, %v948
    %v1010 = vpack.c.b16 %v951, %v950
    %v1011 = vpack.c.b16 %v953, %v952
    %v1012 = vpack.c.b16 %v955, %v954
    %v1013 = vpack.c.b16 %v957, %v956
    %v1014 = vpack.c.b16 %v959, %v958
    %v1015 = vpack.c.b16 %v961, %v960
    %v1016 = vpack.c.b16 %v963, %v962
    %v1017 = vpack.c.b16 %v965, %v964
    %v1018 = vpack.c.b16 %v967, %v966
    %v1019 = vpack.c.b16 %v969, %v968
    %v1020 = vpack.c.b16 %v971, %v970
    %v1021 = vpack.c.b16 %v973, %v972
    %v1022 = vpack.c.b16 %v975, %v974
    %v1023 = vpack.c.b16 %v977, %v976
    %v1024 = vpack.c.b16 %v979, %v978
    %v1025 = vpack.c.b16 %v981, %v980
    %v1026 = vpack.c.b16 %v983, %v982
    %v1027 = vpack.c.b16 %v985, %v984
    %v1028 = vpack.c.b16 %v987, %v986
    %v1029 = vpack.c.b16 %v989, %v988
    %v1030 = vpack.c.b16 %v991, %v990
    %v1031 = vpack.c.b16 %v993, %v992
    %v1032 = vpack.c.b16 %v995, %v994
    %v1033 = vpack.c.b16 %v997, %v996
    %v1034 = vpack.c.b16 %v999, %v998
    %v1035 = vpack.c.b16 %v1001, %v1000
    %v1036 = vpack.c.b16 %v1003, %v1002
    %v1037 = vpack.c.b16 %v1005, %v1004
    %1070 = vmatprep.subr.bf16.mxu0 0
    %1071 = vmatpush1.bf16.msra.mxu0 %v1013
    %1072 = vmatprep.subr.bf16.mxu0 0
    %1073 = vmatpush1.bf16.msra.mxu0 %v1012
    %1074 = vmatprep.subr.bf16.mxu0 0
    %1075 = vmatpush1.bf16.msra.mxu0 %v1011
    %1076 = vmatprep.subr.bf16.mxu0 0
    %1077 = vmatpush1.bf16.msra.mxu0 %v1010
    %1078 = vmatprep.subr.bf16.mxu0 0
    %1079 = vmatpush1.bf16.msra.mxu0 %v1009
    %1080 = vmatprep.subr.bf16.mxu0 0
    %1081 = vmatpush1.bf16.msra.mxu0 %v1008
    %1082 = vmatprep.subr.bf16.mxu0 0
    %1083 = vmatpush1.bf16.msra.mxu0 %v1007
    %1084 = vmatprep.subr.bf16.mxu0 0
    %1085 = vmatpush1.bf16.msra.mxu0 %v1006
    %1086 = vmatprep.subr.bf16.mxu0 0
    %1087 = vmatpush2.bf16.msra.mxu0 %v1021
    %1088 = vmatprep.subr.bf16.mxu0 0
    %1089 = vmatpush2.bf16.msra.mxu0 %v1020
    %1090 = vmatprep.subr.bf16.mxu0 0
    %1091 = vmatpush2.bf16.msra.mxu0 %v1019
    %1092 = vmatprep.subr.bf16.mxu0 0
    %1093 = vmatpush2.bf16.msra.mxu0 %v1018
    %1094 = vmatprep.subr.bf16.mxu0 0
    %1095 = vmatpush2.bf16.msra.mxu0 %v1017
    %1096 = vmatprep.subr.bf16.mxu0 0
    %1097 = vmatpush2.bf16.msra.mxu0 %v1016
    %1098 = vmatprep.subr.bf16.mxu0 0
    %1099 = vmatpush2.bf16.msra.mxu0 %v1015
    %1100 = vmatprep.subr.bf16.mxu0 0
    %1101 = vmatpush2.bf16.msra.mxu0 %v1014
    %1102 = vmatprep.mubr.bf16.mxu0 %v623
    %1103 = vmatmul.mubr.bf16.gmra.mxu0 %v622
    %v1104 = vpop.f32.mrf.mxu0
    %v1105 = vadd.f32 0.0, %v1104
    %v1106 = vpop.f32.mrf.mxu0
    %v1107 = vpop.f32.mrf.mxu0
    %v1108 = vadd.f32 0.0, %v1107
    %v1109 = vpop.f32.mrf.mxu0
    %1110 = vmatprep.mubr.bf16.mxu0 %v627
    %1111 = vmatmul.mubr.bf16.gmra.mxu0 %v626
    %v1112 = vpop.f32.mrf.mxu0
    %v1113 = vadd.f32 0.0, %v1112
    %v1114 = vpop.f32.mrf.mxu0
    %v1115 = vpop.f32.mrf.mxu0
    %v1116 = vadd.f32 0.0, %v1115
    %v1117 = vpop.f32.mrf.mxu0
    %1118 = vmatprep.mubr.bf16.mxu0 %v631
    %1119 = vmatmul.mubr.bf16.gmra.mxu0 %v630
    %v1120 = vpop.f32.mrf.mxu0
    %v1121 = vadd.f32 0.0, %v1120
    %v1122 = vpop.f32.mrf.mxu0
    %v1123 = vpop.f32.mrf.mxu0
    %v1124 = vadd.f32 0.0, %v1123
    %v1125 = vpop.f32.mrf.mxu0
    %1126 = vmatprep.mubr.bf16.mxu0 %v635
    %1127 = vmatmul.mubr.bf16.gmra.mxu0 %v634
    %v1128 = vpop.f32.mrf.mxu0
    %v1129 = vadd.f32 0.0, %v1128
    %v1130 = vpop.f32.mrf.mxu0
    %v1131 = vpop.f32.mrf.mxu0
    %v1132 = vadd.f32 0.0, %v1131
    %v1133 = vpop.f32.mrf.mxu0
    %1134 = vmatprep.mubr.bf16.mxu0 %v639
    %1135 = vmatmul.mubr.bf16.gmra.mxu0 %v638
    %v1136 = vpop.f32.mrf.mxu0
    %v1137 = vadd.f32 0.0, %v1136
    %v1138 = vpop.f32.mrf.mxu0
    %v1139 = vpop.f32.mrf.mxu0
    %v1140 = vadd.f32 0.0, %v1139
    %v1141 = vpop.f32.mrf.mxu0
    %1142 = vmatprep.mubr.bf16.mxu0 %v643
    %1143 = vmatmul.mubr.bf16.gmra.mxu0 %v642
    %v1144 = vpop.f32.mrf.mxu0
    %v1145 = vadd.f32 0.0, %v1144
    %v1146 = vpop.f32.mrf.mxu0
    %v1147 = vpop.f32.mrf.mxu0
    %v1148 = vadd.f32 0.0, %v1147
    %v1149 = vpop.f32.mrf.mxu0
    %1150 = vmatprep.mubr.bf16.mxu0 %v647
    %1151 = vmatmul.mubr.bf16.gmra.mxu0 %v646
    %v1152 = vpop.f32.mrf.mxu0
    %v1153 = vadd.f32 0.0, %v1152
    %v1154 = vpop.f32.mrf.mxu0
    %v1155 = vpop.f32.mrf.mxu0
    %v1156 = vadd.f32 0.0, %v1155
    %v1157 = vpop.f32.mrf.mxu0
    %1158 = vmatprep.mubr.bf16.mxu0 %v651
    %1159 = vmatmul.mubr.bf16.gmra.mxu0 %v650
    %v1160 = vpop.f32.mrf.mxu0
    %v1161 = vadd.f32 0.0, %v1160
    %v1162 = vpop.f32.mrf.mxu0
    %v1163 = vpop.f32.mrf.mxu0
    %v1164 = vadd.f32 0.0, %v1163
    %v1165 = vpop.f32.mrf.mxu0
    %1166 = vmatprep.mubr.bf16.mxu0 %v655
    %1167 = vmatmul.mubr.bf16.gmra.mxu0 %v654
    %v1168 = vpop.f32.mrf.mxu0
    %v1169 = vadd.f32 0.0, %v1168
    %v1170 = vpop.f32.mrf.mxu0
    %v1171 = vpop.f32.mrf.mxu0
    %v1172 = vadd.f32 0.0, %v1171
    %v1173 = vpop.f32.mrf.mxu0
    %1174 = vmatprep.mubr.bf16.mxu0 %v659
    %1175 = vmatmul.mubr.bf16.gmra.mxu0 %v658
    %v1176 = vpop.f32.mrf.mxu0
    %v1177 = vadd.f32 0.0, %v1176
    %v1178 = vpop.f32.mrf.mxu0
    %v1179 = vpop.f32.mrf.mxu0
    %v1180 = vadd.f32 0.0, %v1179
    %v1181 = vpop.f32.mrf.mxu0
    %1182 = vmatprep.mubr.bf16.mxu0 %v663
    %1183 = vmatmul.mubr.bf16.gmra.mxu0 %v662
    %v1184 = vpop.f32.mrf.mxu0
    %v1185 = vadd.f32 0.0, %v1184
    %v1186 = vpop.f32.mrf.mxu0
    %v1187 = vpop.f32.mrf.mxu0
    %v1188 = vadd.f32 0.0, %v1187
    %v1189 = vpop.f32.mrf.mxu0
    %1190 = vmatprep.mubr.bf16.mxu0 %v667
    %1191 = vmatmul.mubr.bf16.gmra.mxu0 %v666
    %v1192 = vpop.f32.mrf.mxu0
    %v1193 = vadd.f32 0.0, %v1192
    %v1194 = vpop.f32.mrf.mxu0
    %v1195 = vpop.f32.mrf.mxu0
    %v1196 = vadd.f32 0.0, %v1195
    %v1197 = vpop.f32.mrf.mxu0
    %1198 = vmatprep.mubr.bf16.mxu0 %v671
    %1199 = vmatmul.mubr.bf16.gmra.mxu0 %v670
    %v1200 = vpop.f32.mrf.mxu0
    %v1201 = vadd.f32 0.0, %v1200
    %v1202 = vpop.f32.mrf.mxu0
    %v1203 = vpop.f32.mrf.mxu0
    %v1204 = vadd.f32 0.0, %v1203
    %v1205 = vpop.f32.mrf.mxu0
    %1206 = vmatprep.mubr.bf16.mxu0 %v675
    %1207 = vmatmul.mubr.bf16.gmra.mxu0 %v674
    %v1208 = vpop.f32.mrf.mxu0
    %v1209 = vadd.f32 0.0, %v1208
    %v1210 = vpop.f32.mrf.mxu0
    %v1211 = vpop.f32.mrf.mxu0
    %v1212 = vadd.f32 0.0, %v1211
    %v1213 = vpop.f32.mrf.mxu0
    %1214 = vmatprep.mubr.bf16.mxu0 %v679
    %1215 = vmatmul.mubr.bf16.gmra.mxu0 %v678
    %v1216 = vpop.f32.mrf.mxu0
    %v1217 = vadd.f32 0.0, %v1216
    %v1218 = vpop.f32.mrf.mxu0
    %v1219 = vpop.f32.mrf.mxu0
    %v1220 = vadd.f32 0.0, %v1219
    %v1221 = vpop.f32.mrf.mxu0
    %1222 = vmatprep.mubr.bf16.mxu0 %v683
    %1223 = vmatmul.mubr.bf16.gmra.mxu0 %v682
    %v1224 = vpop.f32.mrf.mxu0
    %v1225 = vadd.f32 0.0, %v1224
    %v1226 = vpop.f32.mrf.mxu0
    %v1227 = vpop.f32.mrf.mxu0
    %v1228 = vadd.f32 0.0, %v1227
    %v1229 = vpop.f32.mrf.mxu0
    %1230 = vmatprep.mubr.bf16.mxu0 %v687
    %1231 = vmatmul.mubr.bf16.gmra.mxu0 %v686
    %v1232 = vpop.f32.mrf.mxu0
    %v1233 = vadd.f32 0.0, %v1232
    %v1234 = vpop.f32.mrf.mxu0
    %v1235 = vpop.f32.mrf.mxu0
    %v1236 = vadd.f32 0.0, %v1235
    %v1237 = vpop.f32.mrf.mxu0
    %1238 = vmatprep.mubr.bf16.mxu0 %v691
    %1239 = vmatmul.mubr.bf16.gmra.mxu0 %v690
    %v1240 = vpop.f32.mrf.mxu0
    %v1241 = vadd.f32 0.0, %v1240
    %v1242 = vpop.f32.mrf.mxu0
    %v1243 = vpop.f32.mrf.mxu0
    %v1244 = vadd.f32 0.0, %v1243
    %v1245 = vpop.f32.mrf.mxu0
    %1246 = vmatprep.mubr.bf16.mxu0 %v695
    %1247 = vmatmul.mubr.bf16.gmra.mxu0 %v694
    %v1248 = vpop.f32.mrf.mxu0
    %v1249 = vadd.f32 0.0, %v1248
    %v1250 = vpop.f32.mrf.mxu0
    %v1251 = vpop.f32.mrf.mxu0
    %v1252 = vadd.f32 0.0, %v1251
    %v1253 = vpop.f32.mrf.mxu0
    %1254 = vmatprep.mubr.bf16.mxu0 %v699
    %1255 = vmatmul.mubr.bf16.gmra.mxu0 %v698
    %v1256 = vpop.f32.mrf.mxu0
    %v1257 = vadd.f32 0.0, %v1256
    %v1258 = vpop.f32.mrf.mxu0
    %v1259 = vpop.f32.mrf.mxu0
    %v1260 = vadd.f32 0.0, %v1259
    %v1261 = vpop.f32.mrf.mxu0
    %1262 = vmatprep.mubr.bf16.mxu0 %v703
    %1263 = vmatmul.mubr.bf16.gmra.mxu0 %v702
    %v1264 = vpop.f32.mrf.mxu0
    %v1265 = vadd.f32 0.0, %v1264
    %v1266 = vpop.f32.mrf.mxu0
    %v1267 = vpop.f32.mrf.mxu0
    %v1268 = vadd.f32 0.0, %v1267
    %v1269 = vpop.f32.mrf.mxu0
    %1270 = vmatprep.mubr.bf16.mxu0 %v707
    %1271 = vmatmul.mubr.bf16.gmra.mxu0 %v706
    %v1272 = vpop.f32.mrf.mxu0
    %v1273 = vadd.f32 0.0, %v1272
    %v1274 = vpop.f32.mrf.mxu0
    %v1275 = vpop.f32.mrf.mxu0
    %v1276 = vadd.f32 0.0, %v1275
    %v1277 = vpop.f32.mrf.mxu0
    %1278 = vmatprep.mubr.bf16.mxu0 %v711
    %1279 = vmatmul.mubr.bf16.gmra.mxu0 %v710
    %v1280 = vpop.f32.mrf.mxu0
    %v1281 = vadd.f32 0.0, %v1280
    %v1282 = vpop.f32.mrf.mxu0
    %v1283 = vpop.f32.mrf.mxu0
    %v1284 = vadd.f32 0.0, %v1283
    %v1285 = vpop.f32.mrf.mxu0
    %1286 = vmatprep.mubr.bf16.mxu0 %v715
    %1287 = vmatmul.mubr.bf16.gmra.mxu0 %v714
    %v1288 = vpop.f32.mrf.mxu0
    %v1289 = vadd.f32 0.0, %v1288
    %v1290 = vpop.f32.mrf.mxu0
    %v1291 = vpop.f32.mrf.mxu0
    %v1292 = vadd.f32 0.0, %v1291
    %v1293 = vpop.f32.mrf.mxu0
    %1294 = vmatprep.mubr.bf16.mxu0 %v719
    %1295 = vmatmul.mubr.bf16.gmra.mxu0 %v718
    %v1296 = vpop.f32.mrf.mxu0
    %v1297 = vadd.f32 0.0, %v1296
    %v1298 = vpop.f32.mrf.mxu0
    %v1299 = vpop.f32.mrf.mxu0
    %v1300 = vadd.f32 0.0, %v1299
    %v1301 = vpop.f32.mrf.mxu0
    %1302 = vmatprep.mubr.bf16.mxu0 %v723
    %1303 = vmatmul.mubr.bf16.gmra.mxu0 %v722
    %v1304 = vpop.f32.mrf.mxu0
    %v1305 = vadd.f32 0.0, %v1304
    %v1306 = vpop.f32.mrf.mxu0
    %v1307 = vpop.f32.mrf.mxu0
    %v1308 = vadd.f32 0.0, %v1307
    %v1309 = vpop.f32.mrf.mxu0
    %1310 = vmatprep.mubr.bf16.mxu0 %v727
    %1311 = vmatmul.mubr.bf16.gmra.mxu0 %v726
    %v1312 = vpop.f32.mrf.mxu0
    %v1313 = vadd.f32 0.0, %v1312
    %v1314 = vpop.f32.mrf.mxu0
    %v1315 = vpop.f32.mrf.mxu0
    %v1316 = vadd.f32 0.0, %v1315
    %v1317 = vpop.f32.mrf.mxu0
    %1318 = vmatprep.mubr.bf16.mxu0 %v731
    %1319 = vmatmul.mubr.bf16.gmra.mxu0 %v730
    %v1320 = vpop.f32.mrf.mxu0
    %v1321 = vadd.f32 0.0, %v1320
    %v1322 = vpop.f32.mrf.mxu0
    %v1323 = vpop.f32.mrf.mxu0
    %v1324 = vadd.f32 0.0, %v1323
    %v1325 = vpop.f32.mrf.mxu0
    %1326 = vmatprep.mubr.bf16.mxu0 %v735
    %1327 = vmatmul.mubr.bf16.gmra.mxu0 %v734
    %v1328 = vpop.f32.mrf.mxu0
    %v1329 = vadd.f32 0.0, %v1328
    %v1330 = vpop.f32.mrf.mxu0
    %v1331 = vpop.f32.mrf.mxu0
    %v1332 = vadd.f32 0.0, %v1331
    %v1333 = vpop.f32.mrf.mxu0
    %1334 = vmatprep.mubr.bf16.mxu0 %v739
    %1335 = vmatmul.mubr.bf16.gmra.mxu0 %v738
    %v1336 = vpop.f32.mrf.mxu0
    %v1337 = vadd.f32 0.0, %v1336
    %v1338 = vpop.f32.mrf.mxu0
    %v1339 = vpop.f32.mrf.mxu0
    %v1340 = vadd.f32 0.0, %v1339
    %v1341 = vpop.f32.mrf.mxu0
    %1342 = vmatprep.mubr.bf16.mxu0 %v743
    %1343 = vmatmul.mubr.bf16.gmra.mxu0 %v742
    %v1344 = vpop.f32.mrf.mxu0
    %v1345 = vadd.f32 0.0, %v1344
    %v1346 = vpop.f32.mrf.mxu0
    %v1347 = vpop.f32.mrf.mxu0
    %v1348 = vadd.f32 0.0, %v1347
    %v1349 = vpop.f32.mrf.mxu0
    %1350 = vmatprep.mubr.bf16.mxu0 %v747
    %1351 = vmatmul.mubr.bf16.gmra.mxu0 %v746
    %v1352 = vpop.f32.mrf.mxu0
    %v1353 = vadd.f32 0.0, %v1352
    %v1354 = vpop.f32.mrf.mxu0
    %v1355 = vpop.f32.mrf.mxu0
    %v1356 = vadd.f32 0.0, %v1355
    %v1357 = vpop.f32.mrf.mxu0
    %1358 = vdwg.mxu0
    %1359 = vmatprep.subr.bf16.mxu0 0
    %1360 = vmatpush1.bf16.msra.mxu0 %v1029
    %1361 = vmatprep.subr.bf16.mxu0 0
    %1362 = vmatpush1.bf16.msra.mxu0 %v1028
    %1363 = vmatprep.subr.bf16.mxu0 0
    %1364 = vmatpush1.bf16.msra.mxu0 %v1027
    %1365 = vmatprep.subr.bf16.mxu0 0
    %1366 = vmatpush1.bf16.msra.mxu0 %v1026
    %1367 = vmatprep.subr.bf16.mxu0 0
    %1368 = vmatpush1.bf16.msra.mxu0 %v1025
    %1369 = vmatprep.subr.bf16.mxu0 0
    %1370 = vmatpush1.bf16.msra.mxu0 %v1024
    %1371 = vmatprep.subr.bf16.mxu0 0
    %1372 = vmatpush1.bf16.msra.mxu0 %v1023
    %1373 = vmatprep.subr.bf16.mxu0 0
    %1374 = vmatpush1.bf16.msra.mxu0 %v1022
    %1375 = vmatprep.subr.bf16.mxu0 0
    %1376 = vmatpush2.bf16.msra.mxu0 %v1037
    %1377 = vmatprep.subr.bf16.mxu0 0
    %1378 = vmatpush2.bf16.msra.mxu0 %v1036
    %1379 = vmatprep.subr.bf16.mxu0 0
    %1380 = vmatpush2.bf16.msra.mxu0 %v1035
    %1381 = vmatprep.subr.bf16.mxu0 0
    %1382 = vmatpush2.bf16.msra.mxu0 %v1034
    %1383 = vmatprep.subr.bf16.mxu0 0
    %1384 = vmatpush2.bf16.msra.mxu0 %v1033
    %1385 = vmatprep.subr.bf16.mxu0 0
    %1386 = vmatpush2.bf16.msra.mxu0 %v1032
    %1387 = vmatprep.subr.bf16.mxu0 0
    %1388 = vmatpush2.bf16.msra.mxu0 %v1031
    %1389 = vmatprep.subr.bf16.mxu0 0
    %1390 = vmatpush2.bf16.msra.mxu0 %v1030
    %1391 = vmatprep.mubr.bf16.mxu0 %v625
    %1392 = vmatmul.mubr.bf16.gmra.mxu0 %v624
    %v1393 = vpop.f32.mrf.mxu0
    %v1394 = vadd.f32 %v1105, %v1393
    %v1395 = vpop.f32.mrf.mxu0
    %v1396 = vpop.f32.mrf.mxu0
    %v1397 = vadd.f32 %v1108, %v1396
    %v1398 = vpop.f32.mrf.mxu0
    %1399 = vmatprep.mubr.bf16.mxu0 %v629
    %1400 = vmatmul.mubr.bf16.gmra.mxu0 %v628
    %v1401 = vpop.f32.mrf.mxu0
    %v1402 = vadd.f32 %v1113, %v1401
    %v1403 = vpop.f32.mrf.mxu0
    %v1404 = vpop.f32.mrf.mxu0
    %v1405 = vadd.f32 %v1116, %v1404
    %v1406 = vpop.f32.mrf.mxu0
    %1407 = vmatprep.mubr.bf16.mxu0 %v633
    %1408 = vmatmul.mubr.bf16.gmra.mxu0 %v632
    %v1409 = vpop.f32.mrf.mxu0
    %v1410 = vadd.f32 %v1121, %v1409
    %v1411 = vpop.f32.mrf.mxu0
    %v1412 = vpop.f32.mrf.mxu0
    %v1413 = vadd.f32 %v1124, %v1412
    %v1414 = vpop.f32.mrf.mxu0
    %1415 = vmatprep.mubr.bf16.mxu0 %v637
    %1416 = vmatmul.mubr.bf16.gmra.mxu0 %v636
    %v1417 = vpop.f32.mrf.mxu0
    %v1418 = vadd.f32 %v1129, %v1417
    %v1419 = vpop.f32.mrf.mxu0
    %v1420 = vpop.f32.mrf.mxu0
    %v1421 = vadd.f32 %v1132, %v1420
    %v1422 = vpop.f32.mrf.mxu0
    %1423 = vmatprep.mubr.bf16.mxu0 %v641
    %1424 = vmatmul.mubr.bf16.gmra.mxu0 %v640
    %v1425 = vpop.f32.mrf.mxu0
    %v1426 = vadd.f32 %v1137, %v1425
    %v1427 = vpop.f32.mrf.mxu0
    %v1428 = vpop.f32.mrf.mxu0
    %v1429 = vadd.f32 %v1140, %v1428
    %v1430 = vpop.f32.mrf.mxu0
    %1431 = vmatprep.mubr.bf16.mxu0 %v645
    %1432 = vmatmul.mubr.bf16.gmra.mxu0 %v644
    %v1433 = vpop.f32.mrf.mxu0
    %v1434 = vadd.f32 %v1145, %v1433
    %v1435 = vpop.f32.mrf.mxu0
    %v1436 = vpop.f32.mrf.mxu0
    %v1437 = vadd.f32 %v1148, %v1436
    %v1438 = vpop.f32.mrf.mxu0
    %1439 = vmatprep.mubr.bf16.mxu0 %v649
    %1440 = vmatmul.mubr.bf16.gmra.mxu0 %v648
    %v1441 = vpop.f32.mrf.mxu0
    %v1442 = vadd.f32 %v1153, %v1441
    %v1443 = vpop.f32.mrf.mxu0
    %v1444 = vpop.f32.mrf.mxu0
    %v1445 = vadd.f32 %v1156, %v1444
    %v1446 = vpop.f32.mrf.mxu0
    %1447 = vmatprep.mubr.bf16.mxu0 %v653
    %1448 = vmatmul.mubr.bf16.gmra.mxu0 %v652
    %v1449 = vpop.f32.mrf.mxu0
    %v1450 = vadd.f32 %v1161, %v1449
    %v1451 = vpop.f32.mrf.mxu0
    %v1452 = vpop.f32.mrf.mxu0
    %v1453 = vadd.f32 %v1164, %v1452
    %v1454 = vpop.f32.mrf.mxu0
    %1455 = vmatprep.mubr.bf16.mxu0 %v657
    %1456 = vmatmul.mubr.bf16.gmra.mxu0 %v656
    %v1457 = vpop.f32.mrf.mxu0
    %v1458 = vadd.f32 %v1169, %v1457
    %v1459 = vpop.f32.mrf.mxu0
    %v1460 = vpop.f32.mrf.mxu0
    %v1461 = vadd.f32 %v1172, %v1460
    %v1462 = vpop.f32.mrf.mxu0
    %1463 = vmatprep.mubr.bf16.mxu0 %v661
    %1464 = vmatmul.mubr.bf16.gmra.mxu0 %v660
    %v1465 = vpop.f32.mrf.mxu0
    %v1466 = vadd.f32 %v1177, %v1465
    %v1467 = vpop.f32.mrf.mxu0
    %v1468 = vpop.f32.mrf.mxu0
    %v1469 = vadd.f32 %v1180, %v1468
    %v1470 = vpop.f32.mrf.mxu0
    %1471 = vmatprep.mubr.bf16.mxu0 %v665
    %1472 = vmatmul.mubr.bf16.gmra.mxu0 %v664
    %v1473 = vpop.f32.mrf.mxu0
    %v1474 = vadd.f32 %v1185, %v1473
    %v1475 = vpop.f32.mrf.mxu0
    %v1476 = vpop.f32.mrf.mxu0
    %v1477 = vadd.f32 %v1188, %v1476
    %v1478 = vpop.f32.mrf.mxu0
    %1479 = vmatprep.mubr.bf16.mxu0 %v669
    %1480 = vmatmul.mubr.bf16.gmra.mxu0 %v668
    %v1481 = vpop.f32.mrf.mxu0
    %v1482 = vadd.f32 %v1193, %v1481
    %v1483 = vpop.f32.mrf.mxu0
    %v1484 = vpop.f32.mrf.mxu0
    %v1485 = vadd.f32 %v1196, %v1484
    %v1486 = vpop.f32.mrf.mxu0
    %1487 = vmatprep.mubr.bf16.mxu0 %v673
    %1488 = vmatmul.mubr.bf16.gmra.mxu0 %v672
    %v1489 = vpop.f32.mrf.mxu0
    %v1490 = vadd.f32 %v1201, %v1489
    %v1491 = vpop.f32.mrf.mxu0
    %v1492 = vpop.f32.mrf.mxu0
    %v1493 = vadd.f32 %v1204, %v1492
    %v1494 = vpop.f32.mrf.mxu0
    %1495 = vmatprep.mubr.bf16.mxu0 %v677
    %1496 = vmatmul.mubr.bf16.gmra.mxu0 %v676
    %v1497 = vpop.f32.mrf.mxu0
    %v1498 = vadd.f32 %v1209, %v1497
    %v1499 = vpop.f32.mrf.mxu0
    %v1500 = vpop.f32.mrf.mxu0
    %v1501 = vadd.f32 %v1212, %v1500
    %v1502 = vpop.f32.mrf.mxu0
    %1503 = vmatprep.mubr.bf16.mxu0 %v681
    %1504 = vmatmul.mubr.bf16.gmra.mxu0 %v680
    %v1505 = vpop.f32.mrf.mxu0
    %v1506 = vadd.f32 %v1217, %v1505
    %v1507 = vpop.f32.mrf.mxu0
    %v1508 = vpop.f32.mrf.mxu0
    %v1509 = vadd.f32 %v1220, %v1508
    %v1510 = vpop.f32.mrf.mxu0
    %1511 = vmatprep.mubr.bf16.mxu0 %v685
    %1512 = vmatmul.mubr.bf16.gmra.mxu0 %v684
    %v1513 = vpop.f32.mrf.mxu0
    %v1514 = vadd.f32 %v1225, %v1513
    %v1515 = vpop.f32.mrf.mxu0
    %v1516 = vpop.f32.mrf.mxu0
    %v1517 = vadd.f32 %v1228, %v1516
    %v1518 = vpop.f32.mrf.mxu0
    %1519 = vmatprep.mubr.bf16.mxu0 %v689
    %1520 = vmatmul.mubr.bf16.gmra.mxu0 %v688
    %v1521 = vpop.f32.mrf.mxu0
    %v1522 = vadd.f32 %v1233, %v1521
    %v1523 = vpop.f32.mrf.mxu0
    %v1524 = vpop.f32.mrf.mxu0
    %v1525 = vadd.f32 %v1236, %v1524
    %v1526 = vpop.f32.mrf.mxu0
    %1527 = vmatprep.mubr.bf16.mxu0 %v693
    %1528 = vmatmul.mubr.bf16.gmra.mxu0 %v692
    %v1529 = vpop.f32.mrf.mxu0
    %v1530 = vadd.f32 %v1241, %v1529
    %v1531 = vpop.f32.mrf.mxu0
    %v1532 = vpop.f32.mrf.mxu0
    %v1533 = vadd.f32 %v1244, %v1532
    %v1534 = vpop.f32.mrf.mxu0
    %1535 = vmatprep.mubr.bf16.mxu0 %v697
    %1536 = vmatmul.mubr.bf16.gmra.mxu0 %v696
    %v1537 = vpop.f32.mrf.mxu0
    %v1538 = vadd.f32 %v1249, %v1537
    %v1539 = vpop.f32.mrf.mxu0
    %v1540 = vpop.f32.mrf.mxu0
    %v1541 = vadd.f32 %v1252, %v1540
    %v1542 = vpop.f32.mrf.mxu0
    %1543 = vmatprep.mubr.bf16.mxu0 %v701
    %1544 = vmatmul.mubr.bf16.gmra.mxu0 %v700
    %v1545 = vpop.f32.mrf.mxu0
    %v1546 = vadd.f32 %v1257, %v1545
    %v1547 = vpop.f32.mrf.mxu0
    %v1548 = vpop.f32.mrf.mxu0
    %v1549 = vadd.f32 %v1260, %v1548
    %v1550 = vpop.f32.mrf.mxu0
    %1551 = vmatprep.mubr.bf16.mxu0 %v705
    %1552 = vmatmul.mubr.bf16.gmra.mxu0 %v704
    %v1553 = vpop.f32.mrf.mxu0
    %v1554 = vadd.f32 %v1265, %v1553
    %v1555 = vpop.f32.mrf.mxu0
    %v1556 = vpop.f32.mrf.mxu0
    %v1557 = vadd.f32 %v1268, %v1556
    %v1558 = vpop.f32.mrf.mxu0
    %1559 = vmatprep.mubr.bf16.mxu0 %v709
    %1560 = vmatmul.mubr.bf16.gmra.mxu0 %v708
    %v1561 = vpop.f32.mrf.mxu0
    %v1562 = vadd.f32 %v1273, %v1561
    %v1563 = vpop.f32.mrf.mxu0
    %v1564 = vpop.f32.mrf.mxu0
    %v1565 = vadd.f32 %v1276, %v1564
    %v1566 = vpop.f32.mrf.mxu0
    %1567 = vmatprep.mubr.bf16.mxu0 %v713
    %1568 = vmatmul.mubr.bf16.gmra.mxu0 %v712
    %v1569 = vpop.f32.mrf.mxu0
    %v1570 = vadd.f32 %v1281, %v1569
    %v1571 = vpop.f32.mrf.mxu0
    %v1572 = vpop.f32.mrf.mxu0
    %v1573 = vadd.f32 %v1284, %v1572
    %v1574 = vpop.f32.mrf.mxu0
    %1575 = vmatprep.mubr.bf16.mxu0 %v717
    %1576 = vmatmul.mubr.bf16.gmra.mxu0 %v716
    %v1577 = vpop.f32.mrf.mxu0
    %v1578 = vadd.f32 %v1289, %v1577
    %v1579 = vpop.f32.mrf.mxu0
    %v1580 = vpop.f32.mrf.mxu0
    %v1581 = vadd.f32 %v1292, %v1580
    %v1582 = vpop.f32.mrf.mxu0
    %1583 = vmatprep.mubr.bf16.mxu0 %v721
    %1584 = vmatmul.mubr.bf16.gmra.mxu0 %v720
    %v1585 = vpop.f32.mrf.mxu0
    %v1586 = vadd.f32 %v1297, %v1585
    %v1587 = vpop.f32.mrf.mxu0
    %v1588 = vpop.f32.mrf.mxu0
    %v1589 = vadd.f32 %v1300, %v1588
    %v1590 = vpop.f32.mrf.mxu0
    %1591 = vmatprep.mubr.bf16.mxu0 %v725
    %1592 = vmatmul.mubr.bf16.gmra.mxu0 %v724
    %v1593 = vpop.f32.mrf.mxu0
    %v1594 = vadd.f32 %v1305, %v1593
    %v1595 = vpop.f32.mrf.mxu0
    %v1596 = vpop.f32.mrf.mxu0
    %v1597 = vadd.f32 %v1308, %v1596
    %v1598 = vpop.f32.mrf.mxu0
    %1599 = vmatprep.mubr.bf16.mxu0 %v729
    %1600 = vmatmul.mubr.bf16.gmra.mxu0 %v728
    %v1601 = vpop.f32.mrf.mxu0
    %v1602 = vadd.f32 %v1313, %v1601
    %v1603 = vpop.f32.mrf.mxu0
    %v1604 = vpop.f32.mrf.mxu0
    %v1605 = vadd.f32 %v1316, %v1604
    %v1606 = vpop.f32.mrf.mxu0
    %1607 = vmatprep.mubr.bf16.mxu0 %v733
    %1608 = vmatmul.mubr.bf16.gmra.mxu0 %v732
    %v1609 = vpop.f32.mrf.mxu0
    %v1610 = vadd.f32 %v1321, %v1609
    %v1611 = vpop.f32.mrf.mxu0
    %v1612 = vpop.f32.mrf.mxu0
    %v1613 = vadd.f32 %v1324, %v1612
    %v1614 = vpop.f32.mrf.mxu0
    %1615 = vmatprep.mubr.bf16.mxu0 %v737
    %1616 = vmatmul.mubr.bf16.gmra.mxu0 %v736
    %v1617 = vpop.f32.mrf.mxu0
    %v1618 = vadd.f32 %v1329, %v1617
    %v1619 = vpop.f32.mrf.mxu0
    %v1620 = vpop.f32.mrf.mxu0
    %v1621 = vadd.f32 %v1332, %v1620
    %v1622 = vpop.f32.mrf.mxu0
    %1623 = vmatprep.mubr.bf16.mxu0 %v741
    %1624 = vmatmul.mubr.bf16.gmra.mxu0 %v740
    %v1625 = vpop.f32.mrf.mxu0
    %v1626 = vadd.f32 %v1337, %v1625
    %v1627 = vpop.f32.mrf.mxu0
    %v1628 = vpop.f32.mrf.mxu0
    %v1629 = vadd.f32 %v1340, %v1628
    %v1630 = vpop.f32.mrf.mxu0
    %1631 = vmatprep.mubr.bf16.mxu0 %v745
    %1632 = vmatmul.mubr.bf16.gmra.mxu0 %v744
    %v1633 = vpop.f32.mrf.mxu0
    %v1634 = vadd.f32 %v1345, %v1633
    %v1635 = vpop.f32.mrf.mxu0
    %v1636 = vpop.f32.mrf.mxu0
    %v1637 = vadd.f32 %v1348, %v1636
    %v1638 = vpop.f32.mrf.mxu0
    %1639 = vmatprep.mubr.bf16.mxu0 %v749
    %1640 = vmatmul.mubr.bf16.gmra.mxu0 %v748
    %v1641 = vpop.f32.mrf.mxu0
    %v1642 = vadd.f32 %v1353, %v1641
    %v1643 = vpop.f32.mrf.mxu0
    %v1644 = vpop.f32.mrf.mxu0
    %v1645 = vadd.f32 %v1356, %v1644
    %v1646 = vpop.f32.mrf.mxu0
    %1647 = vdwg.mxu0
    %v1648 = vpack.c.bf16 %v1397, %v1394
    %v1649 = vpack.c.bf16 %v1405, %v1402
    %v1650 = vpack.c.bf16 %v1413, %v1410
    %v1651 = vpack.c.bf16 %v1421, %v1418
    %v1652 = vpack.c.bf16 %v1429, %v1426
    %v1653 = vpack.c.bf16 %v1437, %v1434
    %v1654 = vpack.c.bf16 %v1445, %v1442
    %v1655 = vpack.c.bf16 %v1453, %v1450
    %v1656 = vpack.c.bf16 %v1461, %v1458
    %v1657 = vpack.c.bf16 %v1469, %v1466
    %v1658 = vpack.c.bf16 %v1477, %v1474
    %v1659 = vpack.c.bf16 %v1485, %v1482
    %v1660 = vpack.c.bf16 %v1493, %v1490
    %v1661 = vpack.c.bf16 %v1501, %v1498
    %v1662 = vpack.c.bf16 %v1509, %v1506
    %v1663 = vpack.c.bf16 %v1517, %v1514
    %v1664 = vpack.c.bf16 %v1525, %v1522
    %v1665 = vpack.c.bf16 %v1533, %v1530
    %v1666 = vpack.c.bf16 %v1541, %v1538
    %v1667 = vpack.c.bf16 %v1549, %v1546
    %v1668 = vpack.c.bf16 %v1557, %v1554
    %v1669 = vpack.c.bf16 %v1565, %v1562
    %v1670 = vpack.c.bf16 %v1573, %v1570
    %v1671 = vpack.c.bf16 %v1581, %v1578
    %v1672 = vpack.c.bf16 %v1589, %v1586
    %v1673 = vpack.c.bf16 %v1597, %v1594
    %v1674 = vpack.c.bf16 %v1605, %v1602
    %v1675 = vpack.c.bf16 %v1613, %v1610
    %v1676 = vpack.c.bf16 %v1621, %v1618
    %v1677 = vpack.c.bf16 %v1629, %v1626
    %v1678 = vpack.c.bf16 %v1637, %v1634
    %v1679 = vpack.c.bf16 %v1645, %v1642
    %v1712 = vunpack.c.l.b16 %v1648
    %v1713 = vunpack.c.h.b16 %v1648
    %v1714 = vunpack.c.l.b16 %v1649
    %v1715 = vunpack.c.h.b16 %v1649
    %v1716 = vunpack.c.l.b16 %v1650
    %v1717 = vunpack.c.h.b16 %v1650
    %v1718 = vunpack.c.l.b16 %v1651
    %v1719 = vunpack.c.h.b16 %v1651
    %v1720 = vunpack.c.l.b16 %v1652
    %v1721 = vunpack.c.h.b16 %v1652
    %v1722 = vunpack.c.l.b16 %v1653
    %v1723 = vunpack.c.h.b16 %v1653
    %v1724 = vunpack.c.l.b16 %v1654
    %v1725 = vunpack.c.h.b16 %v1654
    %v1726 = vunpack.c.l.b16 %v1655
    %v1727 = vunpack.c.h.b16 %v1655
    %v1728 = vunpack.c.l.b16 %v1656
    %v1729 = vunpack.c.h.b16 %v1656
    %v1730 = vunpack.c.l.b16 %v1657
    %v1731 = vunpack.c.h.b16 %v1657
    %v1732 = vunpack.c.l.b16 %v1658
    %v1733 = vunpack.c.h.b16 %v1658
    %v1734 = vunpack.c.l.b16 %v1659
    %v1735 = vunpack.c.h.b16 %v1659
    %v1736 = vunpack.c.l.b16 %v1660
    %v1737 = vunpack.c.h.b16 %v1660
    %v1738 = vunpack.c.l.b16 %v1661
    %v1739 = vunpack.c.h.b16 %v1661
    %v1740 = vunpack.c.l.b16 %v1662
    %v1741 = vunpack.c.h.b16 %v1662
    %v1742 = vunpack.c.l.b16 %v1663
    %v1743 = vunpack.c.h.b16 %v1663
    %v1744 = vunpack.c.l.b16 %v1664
    %v1745 = vunpack.c.h.b16 %v1664
    %v1746 = vunpack.c.l.b16 %v1665
    %v1747 = vunpack.c.h.b16 %v1665
    %v1748 = vunpack.c.l.b16 %v1666
    %v1749 = vunpack.c.h.b16 %v1666
    %v1750 = vunpack.c.l.b16 %v1667
    %v1751 = vunpack.c.h.b16 %v1667
    %v1752 = vunpack.c.l.b16 %v1668
    %v1753 = vunpack.c.h.b16 %v1668
    %v1754 = vunpack.c.l.b16 %v1669
    %v1755 = vunpack.c.h.b16 %v1669
    %v1756 = vunpack.c.l.b16 %v1670
    %v1757 = vunpack.c.h.b16 %v1670
    %v1758 = vunpack.c.l.b16 %v1671
    %v1759 = vunpack.c.h.b16 %v1671
    %v1760 = vunpack.c.l.b16 %v1672
    %v1761 = vunpack.c.h.b16 %v1672
    %v1762 = vunpack.c.l.b16 %v1673
    %v1763 = vunpack.c.h.b16 %v1673
    %v1764 = vunpack.c.l.b16 %v1674
    %v1765 = vunpack.c.h.b16 %v1674
    %v1766 = vunpack.c.l.b16 %v1675
    %v1767 = vunpack.c.h.b16 %v1675
    %v1768 = vunpack.c.l.b16 %v1676
    %v1769 = vunpack.c.h.b16 %v1676
    %v1770 = vunpack.c.l.b16 %v1677
    %v1771 = vunpack.c.h.b16 %v1677
    %v1772 = vunpack.c.l.b16 %v1678
    %v1773 = vunpack.c.h.b16 %v1678
    %v1774 = vunpack.c.l.b16 %v1679
    %v1775 = vunpack.c.h.b16 %v1679
    %v1776 = vpack.c.b16 %v1712, %v1712
    %v1777 = vpack.c.b16 %v1713, %v1713
    %v1778 = vpack.c.b16 %v1714, %v1714
    %v1779 = vpack.c.b16 %v1715, %v1715
    %v1780 = vpack.c.b16 %v1716, %v1716
    %v1781 = vpack.c.b16 %v1717, %v1717
    %v1782 = vpack.c.b16 %v1718, %v1718
    %v1783 = vpack.c.b16 %v1719, %v1719
    %v1784 = vpack.c.b16 %v1720, %v1720
    %v1785 = vpack.c.b16 %v1721, %v1721
    %v1786 = vpack.c.b16 %v1722, %v1722
    %v1787 = vpack.c.b16 %v1723, %v1723
    %v1788 = vpack.c.b16 %v1724, %v1724
    %v1789 = vpack.c.b16 %v1725, %v1725
    %v1790 = vpack.c.b16 %v1726, %v1726
    %v1791 = vpack.c.b16 %v1727, %v1727
    %v1792 = vpack.c.b16 %v1728, %v1728
    %v1793 = vpack.c.b16 %v1729, %v1729
    %v1794 = vpack.c.b16 %v1730, %v1730
    %v1795 = vpack.c.b16 %v1731, %v1731
    %v1796 = vpack.c.b16 %v1732, %v1732
    %v1797 = vpack.c.b16 %v1733, %v1733
    %v1798 = vpack.c.b16 %v1734, %v1734
    %v1799 = vpack.c.b16 %v1735, %v1735
    %v1800 = vpack.c.b16 %v1736, %v1736
    %v1801 = vpack.c.b16 %v1737, %v1737
    %v1802 = vpack.c.b16 %v1738, %v1738
    %v1803 = vpack.c.b16 %v1739, %v1739
    %v1804 = vpack.c.b16 %v1740, %v1740
    %v1805 = vpack.c.b16 %v1741, %v1741
    %v1806 = vpack.c.b16 %v1742, %v1742
    %v1807 = vpack.c.b16 %v1743, %v1743
    %v1808 = vpack.c.b16 %v1744, %v1744
    %v1809 = vpack.c.b16 %v1745, %v1745
    %v1810 = vpack.c.b16 %v1746, %v1746
    %v1811 = vpack.c.b16 %v1747, %v1747
    %v1812 = vpack.c.b16 %v1748, %v1748
    %v1813 = vpack.c.b16 %v1749, %v1749
    %v1814 = vpack.c.b16 %v1750, %v1750
    %v1815 = vpack.c.b16 %v1751, %v1751
    %v1816 = vpack.c.b16 %v1752, %v1752
    %v1817 = vpack.c.b16 %v1753, %v1753
    %v1818 = vpack.c.b16 %v1754, %v1754
    %v1819 = vpack.c.b16 %v1755, %v1755
    %v1820 = vpack.c.b16 %v1756, %v1756
    %v1821 = vpack.c.b16 %v1757, %v1757
    %v1822 = vpack.c.b16 %v1758, %v1758
    %v1823 = vpack.c.b16 %v1759, %v1759
    %v1824 = vpack.c.b16 %v1760, %v1760
    %v1825 = vpack.c.b16 %v1761, %v1761
    %v1826 = vpack.c.b16 %v1762, %v1762
    %v1827 = vpack.c.b16 %v1763, %v1763
    %v1828 = vpack.c.b16 %v1764, %v1764
    %v1829 = vpack.c.b16 %v1765, %v1765
    %v1830 = vpack.c.b16 %v1766, %v1766
    %v1831 = vpack.c.b16 %v1767, %v1767
    %v1832 = vpack.c.b16 %v1768, %v1768
    %v1833 = vpack.c.b16 %v1769, %v1769
    %v1834 = vpack.c.b16 %v1770, %v1770
    %v1835 = vpack.c.b16 %v1771, %v1771
    %v1836 = vpack.c.b16 %v1772, %v1772
    %v1837 = vpack.c.b16 %v1773, %v1773
    %v1838 = vpack.c.b16 %v1774, %v1774
    %v1839 = vpack.c.b16 %v1775, %v1775
    %1904 = vst [vmem:[#allocation7] sm:$0xf] %v1776
    %1905 = vst [vmem:[#allocation7 + $0x4] sm:$0xf] %v1777
    %1906 = vst [vmem:[#allocation7 + $0x8] sm:$0xf] %v1778
    %1907 = vst [vmem:[#allocation7 + $0xc] sm:$0xf] %v1779
    %1908 = vst [vmem:[#allocation7 + $0x10] sm:$0xf] %v1780
    %1909 = vst [vmem:[#allocation7 + $0x14] sm:$0xf] %v1781
    %1910 = vst [vmem:[#allocation7 + $0x18] sm:$0xf] %v1782
    %1911 = vst [vmem:[#allocation7 + $0x1c] sm:$0xf] %v1783
    %1912 = vst [vmem:[#allocation7 + $0x20] sm:$0xf] %v1784
    %1913 = vst [vmem:[#allocation7 + $0x24] sm:$0xf] %v1785
    %1914 = vst [vmem:[#allocation7 + $0x28] sm:$0xf] %v1786
    %1915 = vst [vmem:[#allocation7 + $0x2c] sm:$0xf] %v1787
    %1916 = vst [vmem:[#allocation7 + $0x30] sm:$0xf] %v1788
    %1917 = vst [vmem:[#allocation7 + $0x34] sm:$0xf] %v1789
    %1918 = vst [vmem:[#allocation7 + $0x38] sm:$0xf] %v1790
    %1919 = vst [vmem:[#allocation7 + $0x3c] sm:$0xf] %v1791
    %1920 = vst [vmem:[#allocation7 + $0x40] sm:$0xf] %v1792
    %1921 = vst [vmem:[#allocation7 + $0x44] sm:$0xf] %v1793
    %1922 = vst [vmem:[#allocation7 + $0x48] sm:$0xf] %v1794
    %1923 = vst [vmem:[#allocation7 + $0x4c] sm:$0xf] %v1795
    %1924 = vst [vmem:[#allocation7 + $0x50] sm:$0xf] %v1796
    %1925 = vst [vmem:[#allocation7 + $0x54] sm:$0xf] %v1797
    %1926 = vst [vmem:[#allocation7 + $0x58] sm:$0xf] %v1798
    %1927 = vst [vmem:[#allocation7 + $0x5c] sm:$0xf] %v1799
    %1928 = vst [vmem:[#allocation7 + $0x60] sm:$0xf] %v1800
    %1929 = vst [vmem:[#allocation7 + $0x64] sm:$0xf] %v1801
    %1930 = vst [vmem:[#allocation7 + $0x68] sm:$0xf] %v1802
    %1931 = vst [vmem:[#allocation7 + $0x6c] sm:$0xf] %v1803
    %1932 = vst [vmem:[#allocation7 + $0x70] sm:$0xf] %v1804
    %1933 = vst [vmem:[#allocation7 + $0x74] sm:$0xf] %v1805
    %1934 = vst [vmem:[#allocation7 + $0x78] sm:$0xf] %v1806
    %1935 = vst [vmem:[#allocation7 + $0x7c] sm:$0xf] %v1807
    %1936 = vst [vmem:[#allocation7 + $0x80] sm:$0xf] %v1808
    %1937 = vst [vmem:[#allocation7 + $0x84] sm:$0xf] %v1809
    %1938 = vst [vmem:[#allocation7 + $0x88] sm:$0xf] %v1810
    %1939 = vst [vmem:[#allocation7 + $0x8c] sm:$0xf] %v1811
    %1940 = vst [vmem:[#allocation7 + $0x90] sm:$0xf] %v1812
    %1941 = vst [vmem:[#allocation7 + $0x94] sm:$0xf] %v1813
    %1942 = vst [vmem:[#allocation7 + $0x98] sm:$0xf] %v1814
    %1943 = vst [vmem:[#allocation7 + $0x9c] sm:$0xf] %v1815
    %1944 = vst [vmem:[#allocation7 + $0xa0] sm:$0xf] %v1816
    %1945 = vst [vmem:[#allocation7 + $0xa4] sm:$0xf] %v1817
    %1946 = vst [vmem:[#allocation7 + $0xa8] sm:$0xf] %v1818
    %1947 = vst [vmem:[#allocation7 + $0xac] sm:$0xf] %v1819
    %1948 = vst [vmem:[#allocation7 + $0xb0] sm:$0xf] %v1820
    %1949 = vst [vmem:[#allocation7 + $0xb4] sm:$0xf] %v1821
    %1950 = vst [vmem:[#allocation7 + $0xb8] sm:$0xf] %v1822
    %1951 = vst [vmem:[#allocation7 + $0xbc] sm:$0xf] %v1823
    %1952 = vst [vmem:[#allocation7 + $0xc0] sm:$0xf] %v1824
    %1953 = vst [vmem:[#allocation7 + $0xc4] sm:$0xf] %v1825
    %1954 = vst [vmem:[#allocation7 + $0xc8] sm:$0xf] %v1826
    %1955 = vst [vmem:[#allocation7 + $0xcc] sm:$0xf] %v1827
    %1956 = vst [vmem:[#allocation7 + $0xd0] sm:$0xf] %v1828
    %1957 = vst [vmem:[#allocation7 + $0xd4] sm:$0xf] %v1829
    %1958 = vst [vmem:[#allocation7 + $0xd8] sm:$0xf] %v1830
    %1959 = vst [vmem:[#allocation7 + $0xdc] sm:$0xf] %v1831
    %1960 = vst [vmem:[#allocation7 + $0xe0] sm:$0xf] %v1832
    %1961 = vst [vmem:[#allocation7 + $0xe4] sm:$0xf] %v1833
    %1962 = vst [vmem:[#allocation7 + $0xe8] sm:$0xf] %v1834
    %1963 = vst [vmem:[#allocation7 + $0xec] sm:$0xf] %v1835
    %1964 = vst [vmem:[#allocation7 + $0xf0] sm:$0xf] %v1836
    %1965 = vst [vmem:[#allocation7 + $0xf4] sm:$0xf] %v1837
    %1966 = vst [vmem:[#allocation7 + $0xf8] sm:$0xf] %v1838
    %1967 = vst [vmem:[#allocation7 + $0xfc] sm:$0xf] %v1839
    // Predicated region
    $region18: #{tpu_custom_call.1} parent=1 // pred_check
      _
    $region19: #{tpu_custom_call.1} parent=1 // pred_check_branch
      %1969 = sbr.rel (0) target = $region21
    $region20: #{tpu_custom_call.1} parent=1 // pred_region
      %s1971 = ssub.s32 4096, 4096
      %1972 = vsyncadd [#allocation4], %s1971
      %s1973 = sshll.u32 [#allocation7], 4
      %s1974 = int_to_ptr.vmem [resolvable:$true] %s1973
      %1979 = dma.vmem_to_hbm [thread:$0]  %s1974, 4096, %s2, [#allocation4], 64, 64, 4
    $region21: #{tpu_custom_call.1} parent=1 // pred_fallthru
      _
    // Predicated region
    $region22: #{tpu_custom_call.1} parent=1 // pred_check
      _
    $region23: #{tpu_custom_call.1} parent=1 // pred_check_branch
      %1981 = sbr.rel (0) target = $region25
    $region24: #{tpu_custom_call.1} parent=1 // pred_region
      %1982 = dma.done [#allocation4], 4096
    $region25: #{tpu_custom_call.1} parent=1 // pred_fallthru
      _
    %1983 = vsyncpa [#allocation3], 1
    %1984 = vsyncpa [#allocation6], 1
    %1985 = vsyncpa [#allocation4], 1

</llo_original>
